<compile_context>
chip_gen: v7x
topology: tpu7x:2x2x1
jax: 0.10.0
libtpu: 0.0.40
codegen_flags: <defaults>
</compile_context>

<pallas_src>
import functools

import jax
import jax.numpy as jnp
import numpy as np
from jax.experimental import pallas as pl
from jax.experimental.pallas import tpu as pltpu


def ff_vae_kernel(
    # inputs
    alpha_ref, xe_ref,
    ew1, eb1, ew2, eb2, ehw, ehb,
    dw1, db1, dw2, db2, dhw, dhb,
    # output: lane-dense slab [ .. | lv_z | mu_z | mu_x | lv_x | pad ]
    out_ref,
    *, in_dim, lat, out_dim, min_lv_enc, min_lv_dec,
):
    alpha = alpha_ref[0, 0]                       # shared PReLU slope (scalar)

    def prelu(h):
        return jnp.where(h > 0, h, alpha * h)

    def linear(h, w_ref, b_ref):
        # w_ref: [in, out] (pre-transposed), b_ref: [1, out]
        return jnp.dot(h, w_ref[...], preferred_element_type=jnp.float32) + b_ref[...]

    xe = xe_ref[...]                              # (TB, W): [x | eps | 0...]
    tb, W = xe.shape
    lane = jax.lax.broadcasted_iota(jnp.int32, (tb, W), 1)
    # Slab lane layout (fixed by the wrapper's weight padding):
    #   [in_dim, in_dim+lat)                 : s_z -> lv_z   (== eps lanes of xe)
    #   [in_dim+lat, in_dim+2*lat)           : mu_z
    #   [in_dim+2*lat, +out_dim)             : mu_x
    #   [in_dim+2*lat+out_dim, +out_dim)     : s_x -> lv_x
    lv_z_lanes = (lane >= in_dim) & (lane < in_dim + lat)
    lv_x_lanes = ((lane >= in_dim + 2 * lat + out_dim)
                  & (lane < in_dim + 2 * lat + 2 * out_dim))

    # ----- encoder MLP (eps lanes of xe multiply zero rows of ew1 -> inert) -----
    h = prelu(linear(xe, ew1, eb1))
    h = prelu(linear(h, ew2, eb2))
    head_z = linear(h, ehw, ehb)                  # (TB, W): s_z | mu_z at their lanes, 0 elsewhere
    t_z = jnp.exp(head_z) + min_lv_enc            # full-width: same vreg count as lat lanes
    enc_part = jnp.where(lv_z_lanes, jnp.log(t_z), head_z)

    # ----- reparameterize fused into decoder layer 1 -----
    # v holds eps*std at the s_z lanes and mu_z at the mu_z lanes; dw1 has the
    # decoder W1 rows duplicated at both lane groups, so v @ dw1 == z @ W1.
    v = jnp.where(lv_z_lanes, xe * jnp.sqrt(t_z), head_z)
    h = prelu(linear(v, dw1, db1))
    h = prelu(linear(h, dw2, db2))
    head_x = linear(h, dhw, dhb)                  # (TB, W): mu_x | s_x at their lanes
    t_x = jnp.exp(head_x) + min_lv_dec
    dec_part = jnp.where(lv_x_lanes, jnp.log(t_x), head_x)

    # Non-overlapping lane regions (each part is exactly 0 outside its own
    # lanes), so a single add assembles the slab: one unmasked 128-wide store.
    out_ref[...] = enc_part + dec_part


def ff_vae_forward(x, eps, alpha, enc, dec, *, min_lv_enc, min_lv_dec,
                   max_tb=1024, min_tiles=2):
    """Full FF_VAE forward pass: (mu_z, logvar_z, mu_x, logvar_x)."""
    B, in_dim = x.shape
    lat = enc["wm"].shape[1]
    out_dim = dec["wm"].shape[1]
    hid_e = enc["w1"].shape[1]
    hid_d = dec["w1"].shape[1]
    f32 = jnp.float32

    # Lane offsets in the shared (input-width == output-width) slab.
    off_sz = in_dim                 # s_z / lv_z  (aligned with eps in the input slab)
    off_mz = in_dim + lat           # mu_z
    off_mx = in_dim + 2 * lat       # mu_x
    off_lx = in_dim + 2 * lat + out_dim   # s_x / lv_x
    used = in_dim + 2 * lat + 2 * out_dim
    W = pl.cdiv(max(used, in_dim + lat), 128) * 128   # lane-dense slab width

    # ---- fused, lane-positioned input slab: [x | eps | 0] ----
    xe = (jnp.zeros((B, W), f32)
          .at[:, :in_dim].set(x)
          .at[:, off_sz:off_sz + lat].set(eps))

    # ---- zero-padded / lane-positioned weights (one-time HBM prep) ----
    ew1 = jnp.zeros((W, hid_e), f32).at[:in_dim, :].set(enc["w1"])
    eb1, ew2, eb2 = enc["b1"], enc["w2"], enc["b2"]
    ehw = (jnp.zeros((hid_e, W), f32)
           .at[:, off_sz:off_sz + lat].set(enc["wlv"])
           .at[:, off_mz:off_mz + lat].set(enc["wm"]))
    ehb = (jnp.zeros((1, W), f32)
           .at[:, off_sz:off_sz + lat].set(enc["blv"])
           .at[:, off_mz:off_mz + lat].set(enc["bm"]))
    # Decoder W1 duplicated at the eps*std lanes and the mu_z lanes -> the
    # matmul itself sums mu_z + eps*std (no roll / slice in the kernel).
    dw1 = (jnp.zeros((W, hid_d), f32)
           .at[off_sz:off_sz + lat, :].set(dec["w1"])
           .at[off_mz:off_mz + lat, :].set(dec["w1"]))
    db1, dw2, db2 = dec["b1"], dec["w2"], dec["b2"]
    dhw = (jnp.zeros((hid_d, W), f32)
           .at[:, off_mx:off_mx + out_dim].set(dec["wm"])
           .at[:, off_lx:off_lx + out_dim].set(dec["wlv"]))
    dhb = (jnp.zeros((1, W), f32)
           .at[:, off_mx:off_mx + out_dim].set(dec["bm"])
           .at[:, off_lx:off_lx + out_dim].set(dec["blv"]))

    # ---- batch tiling: as large as possible, but >= min_tiles grid steps so
    # the v7x megacore split via dimension_semantics=("parallel",) has work. ----
    n_tiles = max(min_tiles, pl.cdiv(B, max_tb))
    tb = ((B + n_tiles - 1) // n_tiles + 7) // 8 * 8   # sublane-aligned rows/tile
    B_pad = n_tiles * tb
    if B_pad != B:
        xe = jnp.pad(xe, ((0, B_pad - B), (0, 0)))

    batch_spec = pl.BlockSpec((tb, W), lambda i: (i, 0))

    def const_spec(arr):
        # Weights identical for every batch tile: constant index_map keeps them
        # VMEM-resident (no per-step re-DMA).  When scaling, also consider
        # pipeline_mode=pl.Buffered(1) to drop their second buffer.
        return pl.BlockSpec(arr.shape, lambda i: (0, 0))

    smem = pl.BlockSpec(memory_space=pltpu.MemorySpace.SMEM)

    in_specs = [
        smem,                     # alpha (PReLU slope scalar)
        batch_spec,               # fused x|eps slab
        const_spec(ew1), const_spec(eb1), const_spec(ew2), const_spec(eb2),
        const_spec(ehw), const_spec(ehb),
        const_spec(dw1), const_spec(db1), const_spec(dw2), const_spec(db2),
        const_spec(dhw), const_spec(dhb),
    ]

    # Advisory cost estimate for the XLA scheduler.
    flops = 2 * B_pad * (W * hid_e + hid_e * hid_e + hid_e * W
                         + W * hid_d + hid_d * hid_d + hid_d * W)
    transcendentals = 5 * B_pad * W          # exp/log/sqrt over full slab width
    weight_bytes = 4 * (W * hid_e + hid_e * hid_e + hid_e * W
                        + W * hid_d + hid_d * hid_d + hid_d * W
                        + 2 * (hid_e + hid_d) + 2 * W + 1)
    bytes_accessed = 4 * 2 * B_pad * W + weight_bytes

    kernel = functools.partial(
        ff_vae_kernel, in_dim=in_dim, lat=lat, out_dim=out_dim,
        min_lv_enc=min_lv_enc, min_lv_dec=min_lv_dec)

    slab = pl.pallas_call(
        kernel,
        out_shape=jax.ShapeDtypeStruct((B_pad, W), f32),
        grid=(n_tiles,),
        in_specs=in_specs,
        out_specs=pl.BlockSpec((tb, W), lambda i: (i, 0)),
        compiler_params=pltpu.CompilerParams(
            dimension_semantics=("parallel",),      # megacore batch split on v7x
            vmem_limit_bytes=32 * 1024 * 1024,      # explicit budget (fits all gens)
        ),
        cost_estimate=pl.CostEstimate(
            flops=flops, transcendentals=transcendentals,
            bytes_accessed=bytes_accessed),
    )(alpha, xe,
      ew1, eb1, ew2, eb2, ehw, ehb,
      dw1, db1, dw2, db2, dhw, dhb)

    mu_z = slab[:B, off_mz:off_mz + lat]
    lv_z = slab[:B, off_sz:off_sz + lat]
    mu_x = slab[:B, off_mx:off_mx + out_dim]
    lv_x = slab[:B, off_lx:off_lx + out_dim]
    return mu_z, lv_z, mu_x, lv_x


# ----------------------------- parameter setup -----------------------------
def init_linear(key, fan_in, fan_out):
    """PyTorch-style Linear init: U(-1/sqrt(fan_in), 1/sqrt(fan_in)).

    Returns W pre-transposed to [fan_in, fan_out] and bias as [1, fan_out].
    """
    kw, kb = jax.random.split(key)
    bound = 1.0 / np.sqrt(fan_in)
    w = jax.random.uniform(kw, (fan_in, fan_out), jnp.float32, -bound, bound)
    b = jax.random.uniform(kb, (1, fan_out), jnp.float32, -bound, bound)
    return w, b


def make_encdec_params(key, in_dim, hid_dim, out_dim_m, out_dim_lv):
    k1, k2, k3, k4 = jax.random.split(key, 4)
    w1, b1 = init_linear(k1, in_dim, hid_dim)
    w2, b2 = init_linear(k2, hid_dim, hid_dim)
    wm, bm = init_linear(k3, hid_dim, out_dim_m)
    wlv, blv = init_linear(k4, hid_dim, out_dim_lv)
    return dict(w1=w1, b1=b1, w2=w2, b2=b2, wm=wm, bm=bm, wlv=wlv, blv=blv)


def numpy_reference(x, eps, alpha, enc, dec, min_lv_enc, min_lv_dec):
    """Float64 host reference (exact semantics of the PyTorch module)."""
    x = np.asarray(x, np.float64)
    eps = np.asarray(eps, np.float64)

    def prelu(h):
        return np.where(h > 0, h, alpha * h)

    def lin(h, w, b):
        return h @ np.asarray(w, np.float64) + np.asarray(b, np.float64)

    h = prelu(lin(x, enc["w1"], enc["b1"]))
    h = prelu(lin(h, enc["w2"], enc["b2"]))
    mu_z = lin(h, enc["wm"], enc["bm"])
    lv_z = np.log(np.exp(lin(h, enc["wlv"], enc["blv"])) + min_lv_enc)
    z = mu_z + eps * np.exp(0.5 * lv_z)
    h = prelu(lin(z, dec["w1"], dec["b1"]))
    h = prelu(lin(h, dec["w2"], dec["b2"]))
    mu_x = lin(h, dec["wm"], dec["bm"])
    lv_x = np.log(np.exp(lin(h, dec["wlv"], dec["blv"])) + min_lv_dec)
    return mu_z, lv_z, mu_x, lv_x


if __name__ == "__main__":
    # Shapes consistent with the module: encoder in_dim=32, hid=32 (2 layers),
    # latent=16; decoder in_dim=16, hid=32, out=32.  B=256 -> 2 batch tiles of
    # 128 rows (>= 2 tiles so v7x megacore has work on both TensorCores).
    B, IN_DIM, HID, LAT = 256, 32, 32, 16
    MIN_LV = -10.0
    min_lv = float(np.exp(MIN_LV))

    key = jax.random.PRNGKey(0)
    kx, keps, kenc, kdec = jax.random.split(key, 4)

    x = jax.random.normal(kx, (B, IN_DIM), jnp.float32)
    eps = jax.random.normal(keps, (B, LAT), jnp.float32)   # reparameterize noise
    alpha = jnp.full((1, 1), 0.25, jnp.float32)             # PReLU default init

    enc = make_encdec_params(kenc, IN_DIM, HID, LAT, LAT)
    dec = make_encdec_params(kdec, LAT, HID, IN_DIM, IN_DIM)

    outs = ff_vae_forward(x, eps, alpha, enc, dec,
                          min_lv_enc=min_lv, min_lv_dec=min_lv)
    outs = jax.block_until_ready(outs)
    mu_z, lv_z, mu_x, lv_x = outs

    # Host float64 reference; tolerance loose enough to cover the MXU's default
    # reduced-precision f32 matmul passes, but far below any layout/semantics bug.
    ref = numpy_reference(np.asarray(x), np.asarray(eps), 0.25,
                          {k: np.asarray(v) for k, v in enc.items()},
                          {k: np.asarray(v) for k, v in dec.items()},
                          min_lv, min_lv)
    for got, want in zip(outs, ref):
        np.testing.assert_allclose(np.asarray(got), want, rtol=2e-2, atol=2e-2)

    assert mu_z.shape == (B, LAT) and lv_z.shape == (B, LAT)
    assert mu_x.shape == (B, IN_DIM) and lv_x.shape == (B, IN_DIM)
    print("KERNEL_OK")
</pallas_src>

<mosaic_0001>
module attributes {stable_mosaic.version = 11 : i64} {
  func.func @ff_vae_kernel(%arg0: i32, %arg1: memref<1x1xf32, #tpu.memory_space<smem>>, %arg2: memref<128x128xf32, #tpu.memory_space<vmem>>, %arg3: memref<128x32xf32, #tpu.memory_space<vmem>>, %arg4: memref<1x32xf32, #tpu.memory_space<vmem>>, %arg5: memref<32x32xf32, #tpu.memory_space<vmem>>, %arg6: memref<1x32xf32, #tpu.memory_space<vmem>>, %arg7: memref<32x128xf32, #tpu.memory_space<vmem>>, %arg8: memref<1x128xf32, #tpu.memory_space<vmem>>, %arg9: memref<128x32xf32, #tpu.memory_space<vmem>>, %arg10: memref<1x32xf32, #tpu.memory_space<vmem>>, %arg11: memref<32x32xf32, #tpu.memory_space<vmem>>, %arg12: memref<1x32xf32, #tpu.memory_space<vmem>>, %arg13: memref<32x128xf32, #tpu.memory_space<vmem>>, %arg14: memref<1x128xf32, #tpu.memory_space<vmem>>, %arg15: memref<128x128xf32, #tpu.memory_space<vmem>>) attributes {dimension_semantics = [#tpu.dimension_semantics<parallel>], iteration_bounds = array<i64: 2>, scalar_prefetch = 0 : i64, scratch_operands = 0 : i64, tpu.core_type = #tpu.core_type<tc>, window_params = [{transform_indices = @transform_0, window_bounds = array<i64: 1, 1>}, {transform_indices = @transform_1, window_bounds = array<i64: 128, 128>}, {pipeline_mode = #tpu.pipeline_mode<synchronous>, transform_indices = @transform_2, window_bounds = array<i64: 128, 32>}, {pipeline_mode = #tpu.pipeline_mode<synchronous>, transform_indices = @transform_3, window_bounds = array<i64: 1, 32>}, {pipeline_mode = #tpu.pipeline_mode<synchronous>, transform_indices = @transform_4, window_bounds = array<i64: 32, 32>}, {pipeline_mode = #tpu.pipeline_mode<synchronous>, transform_indices = @transform_5, window_bounds = array<i64: 1, 32>}, {pipeline_mode = #tpu.pipeline_mode<synchronous>, transform_indices = @transform_6, window_bounds = array<i64: 32, 128>}, {pipeline_mode = #tpu.pipeline_mode<synchronous>, transform_indices = @transform_7, window_bounds = array<i64: 1, 128>}, {pipeline_mode = #tpu.pipeline_mode<synchronous>, transform_indices = @transform_8, window_bounds = array<i64: 128, 32>}, {pipeline_mode = #tpu.pipeline_mode<synchronous>, transform_indices = @transform_9, window_bounds = array<i64: 1, 32>}, {pipeline_mode = #tpu.pipeline_mode<synchronous>, transform_indices = @transform_10, window_bounds = array<i64: 32, 32>}, {pipeline_mode = #tpu.pipeline_mode<synchronous>, transform_indices = @transform_11, window_bounds = array<i64: 1, 32>}, {pipeline_mode = #tpu.pipeline_mode<synchronous>, transform_indices = @transform_12, window_bounds = array<i64: 32, 128>}, {pipeline_mode = #tpu.pipeline_mode<synchronous>, transform_indices = @transform_13, window_bounds = array<i64: 1, 128>}, {transform_indices = @transform_14, window_bounds = array<i64: 128, 128>}]} {
    %c0 = arith.constant 0 : index
    %c0_0 = arith.constant 0 : index
    %0 = memref.load %arg1[%c0, %c0_0] : memref<1x1xf32, #tpu.memory_space<smem>>
    %c0_1 = arith.constant 0 : index
    %c0_2 = arith.constant 0 : index
    %1 = vector.load %arg2[%c0_1, %c0_2] : memref<128x128xf32, #tpu.memory_space<vmem>>, vector<128x128xf32>
    %2 = tpu.iota {dimensions = array<i32: 1>} : vector<128x128xi32>
    %c32_i32 = arith.constant 32 : i32
    %3 = vector.broadcast %c32_i32 : i32 to vector<128x128xi32>
    %4 = arith.cmpi sge, %2, %3 : vector<128x128xi32>
    %c48_i32 = arith.constant 48 : i32
    %5 = vector.broadcast %c48_i32 : i32 to vector<128x128xi32>
    %6 = arith.cmpi slt, %2, %5 : vector<128x128xi32>
    %7 = arith.andi %4, %6 : vector<128x128xi1>
    %c96_i32 = arith.constant 96 : i32
    %8 = vector.broadcast %c96_i32 : i32 to vector<128x128xi32>
    %9 = arith.cmpi sge, %2, %8 : vector<128x128xi32>
    %c128_i32 = arith.constant 128 : i32
    %10 = vector.broadcast %c128_i32 : i32 to vector<128x128xi32>
    %11 = arith.cmpi slt, %2, %10 : vector<128x128xi32>
    %12 = arith.andi %9, %11 : vector<128x128xi1>
    %c0_3 = arith.constant 0 : index
    %c0_4 = arith.constant 0 : index
    %13 = vector.load %arg3[%c0_3, %c0_4] : memref<128x32xf32, #tpu.memory_space<vmem>>, vector<128x32xf32>
    %cst = arith.constant dense<0.000000e+00> : vector<128x32xf32>
    %14 = tpu.matmul %1, %13, %cst {dimension_numbers = #tpu.dot_dimension_numbers<[1], [0], [0], [1], [0, 0, 1, 1], [], []>} : vector<128x128xf32>, vector<128x32xf32>, vector<128x32xf32> -> vector<128x32xf32>
    %c0_5 = arith.constant 0 : index
    %c0_6 = arith.constant 0 : index
    %15 = vector.load %arg4[%c0_5, %c0_6] : memref<1x32xf32, #tpu.memory_space<vmem>>, vector<1x32xf32>
    %16 = vector.broadcast %15 : vector<1x32xf32> to vector<128x32xf32>
    %17 = arith.addf %14, %16 : vector<128x32xf32>
    %cst_7 = arith.constant 0.000000e+00 : f32
    %18 = vector.broadcast %cst_7 : f32 to vector<128x32xf32>
    %19 = arith.cmpf ogt, %17, %18 : vector<128x32xf32>
    %20 = vector.broadcast %0 : f32 to vector<128x32xf32>
    %21 = arith.mulf %20, %17 : vector<128x32xf32>
    %22 = arith.select %19, %17, %21 : vector<128x32xi1>, vector<128x32xf32>
    %c0_8 = arith.constant 0 : index
    %c0_9 = arith.constant 0 : index
    %23 = vector.load %arg5[%c0_8, %c0_9] : memref<32x32xf32, #tpu.memory_space<vmem>>, vector<32x32xf32>
    %cst_10 = arith.constant dense<0.000000e+00> : vector<128x32xf32>
    %24 = tpu.matmul %22, %23, %cst_10 {dimension_numbers = #tpu.dot_dimension_numbers<[1], [0], [0], [1], [0, 0, 1, 1], [], []>} : vector<128x32xf32>, vector<32x32xf32>, vector<128x32xf32> -> vector<128x32xf32>
    %c0_11 = arith.constant 0 : index
    %c0_12 = arith.constant 0 : index
    %25 = vector.load %arg6[%c0_11, %c0_12] : memref<1x32xf32, #tpu.memory_space<vmem>>, vector<1x32xf32>
    %26 = vector.broadcast %25 : vector<1x32xf32> to vector<128x32xf32>
    %27 = arith.addf %24, %26 : vector<128x32xf32>
    %cst_13 = arith.constant 0.000000e+00 : f32
    %28 = vector.broadcast %cst_13 : f32 to vector<128x32xf32>
    %29 = arith.cmpf ogt, %27, %28 : vector<128x32xf32>
    %30 = vector.broadcast %0 : f32 to vector<128x32xf32>
    %31 = arith.mulf %30, %27 : vector<128x32xf32>
    %32 = arith.select %29, %27, %31 : vector<128x32xi1>, vector<128x32xf32>
    %c0_14 = arith.constant 0 : index
    %c0_15 = arith.constant 0 : index
    %33 = vector.load %arg7[%c0_14, %c0_15] : memref<32x128xf32, #tpu.memory_space<vmem>>, vector<32x128xf32>
    %cst_16 = arith.constant dense<0.000000e+00> : vector<128x128xf32>
    %34 = tpu.matmul %32, %33, %cst_16 {dimension_numbers = #tpu.dot_dimension_numbers<[1], [0], [0], [1], [0, 0, 1, 1], [], []>} : vector<128x32xf32>, vector<32x128xf32>, vector<128x128xf32> -> vector<128x128xf32>
    %c0_17 = arith.constant 0 : index
    %c0_18 = arith.constant 0 : index
    %35 = vector.load %arg8[%c0_17, %c0_18] : memref<1x128xf32, #tpu.memory_space<vmem>>, vector<1x128xf32>
    %36 = vector.broadcast %35 : vector<1x128xf32> to vector<128x128xf32>
    %37 = arith.addf %34, %36 : vector<128x128xf32>
    %38 = math.exp %37 : vector<128x128xf32>
    %cst_19 = arith.constant 4.5399931E-5 : f32
    %39 = vector.broadcast %cst_19 : f32 to vector<128x128xf32>
    %40 = arith.addf %38, %39 : vector<128x128xf32>
    %41 = math.log %40 : vector<128x128xf32>
    %42 = arith.select %7, %41, %37 : vector<128x128xi1>, vector<128x128xf32>
    %43 = math.sqrt %40 : vector<128x128xf32>
    %44 = arith.mulf %1, %43 : vector<128x128xf32>
    %45 = arith.select %7, %44, %37 : vector<128x128xi1>, vector<128x128xf32>
    %c0_20 = arith.constant 0 : index
    %c0_21 = arith.constant 0 : index
    %46 = vector.load %arg9[%c0_20, %c0_21] : memref<128x32xf32, #tpu.memory_space<vmem>>, vector<128x32xf32>
    %cst_22 = arith.constant dense<0.000000e+00> : vector<128x32xf32>
    %47 = tpu.matmul %45, %46, %cst_22 {dimension_numbers = #tpu.dot_dimension_numbers<[1], [0], [0], [1], [0, 0, 1, 1], [], []>} : vector<128x128xf32>, vector<128x32xf32>, vector<128x32xf32> -> vector<128x32xf32>
    %c0_23 = arith.constant 0 : index
    %c0_24 = arith.constant 0 : index
    %48 = vector.load %arg10[%c0_23, %c0_24] : memref<1x32xf32, #tpu.memory_space<vmem>>, vector<1x32xf32>
    %49 = vector.broadcast %48 : vector<1x32xf32> to vector<128x32xf32>
    %50 = arith.addf %47, %49 : vector<128x32xf32>
    %cst_25 = arith.constant 0.000000e+00 : f32
    %51 = vector.broadcast %cst_25 : f32 to vector<128x32xf32>
    %52 = arith.cmpf ogt, %50, %51 : vector<128x32xf32>
    %53 = vector.broadcast %0 : f32 to vector<128x32xf32>
    %54 = arith.mulf %53, %50 : vector<128x32xf32>
    %55 = arith.select %52, %50, %54 : vector<128x32xi1>, vector<128x32xf32>
    %c0_26 = arith.constant 0 : index
    %c0_27 = arith.constant 0 : index
    %56 = vector.load %arg11[%c0_26, %c0_27] : memref<32x32xf32, #tpu.memory_space<vmem>>, vector<32x32xf32>
    %cst_28 = arith.constant dense<0.000000e+00> : vector<128x32xf32>
    %57 = tpu.matmul %55, %56, %cst_28 {dimension_numbers = #tpu.dot_dimension_numbers<[1], [0], [0], [1], [0, 0, 1, 1], [], []>} : vector<128x32xf32>, vector<32x32xf32>, vector<128x32xf32> -> vector<128x32xf32>
    %c0_29 = arith.constant 0 : index
    %c0_30 = arith.constant 0 : index
    %58 = vector.load %arg12[%c0_29, %c0_30] : memref<1x32xf32, #tpu.memory_space<vmem>>, vector<1x32xf32>
    %59 = vector.broadcast %58 : vector<1x32xf32> to vector<128x32xf32>
    %60 = arith.addf %57, %59 : vector<128x32xf32>
    %cst_31 = arith.constant 0.000000e+00 : f32
    %61 = vector.broadcast %cst_31 : f32 to vector<128x32xf32>
    %62 = arith.cmpf ogt, %60, %61 : vector<128x32xf32>
    %63 = vector.broadcast %0 : f32 to vector<128x32xf32>
    %64 = arith.mulf %63, %60 : vector<128x32xf32>
    %65 = arith.select %62, %60, %64 : vector<128x32xi1>, vector<128x32xf32>
    %c0_32 = arith.constant 0 : index
    %c0_33 = arith.constant 0 : index
    %66 = vector.load %arg13[%c0_32, %c0_33] : memref<32x128xf32, #tpu.memory_space<vmem>>, vector<32x128xf32>
    %cst_34 = arith.constant dense<0.000000e+00> : vector<128x128xf32>
    %67 = tpu.matmul %65, %66, %cst_34 {dimension_numbers = #tpu.dot_dimension_numbers<[1], [0], [0], [1], [0, 0, 1, 1], [], []>} : vector<128x32xf32>, vector<32x128xf32>, vector<128x128xf32> -> vector<128x128xf32>
    %c0_35 = arith.constant 0 : index
    %c0_36 = arith.constant 0 : index
    %68 = vector.load %arg14[%c0_35, %c0_36] : memref<1x128xf32, #tpu.memory_space<vmem>>, vector<1x128xf32>
    %69 = vector.broadcast %68 : vector<1x128xf32> to vector<128x128xf32>
    %70 = arith.addf %67, %69 : vector<128x128xf32>
    %71 = math.exp %70 : vector<128x128xf32>
    %cst_37 = arith.constant 4.5399931E-5 : f32
    %72 = vector.broadcast %cst_37 : f32 to vector<128x128xf32>
    %73 = arith.addf %71, %72 : vector<128x128xf32>
    %74 = math.log %73 : vector<128x128xf32>
    %75 = arith.select %12, %74, %70 : vector<128x128xi1>, vector<128x128xf32>
    %76 = arith.addf %42, %75 : vector<128x128xf32>
    %c0_38 = arith.constant 0 : index
    %c0_39 = arith.constant 0 : index
    %77 = vector.load %arg15[%c0_38, %c0_39] : memref<128x128xf32, #tpu.memory_space<vmem>>, vector<128x128xf32>
    tpu.vector_store %arg15[%c0_38, %c0_39], %76 {strides = array<i32>} : memref<128x128xf32, #tpu.memory_space<vmem>>, vector<128x128xf32>,
    return
  }
  func.func @transform_0(%arg0: i32) -> (i32, i32) {
    %c0_i32 = arith.constant 0 : i32
    %c0_i32_0 = arith.constant 0 : i32
    %c0_i32_1 = arith.constant 0 : i32
    return %c0_i32, %c0_i32_0 : i32, i32
  }
  func.func @transform_1(%arg0: i32) -> (i32, i32) {
    %c0_i32 = arith.constant 0 : i32
    %c0_i32_0 = arith.constant 0 : i32
    return %arg0, %c0_i32 : i32, i32
  }
  func.func @transform_2(%arg0: i32) -> (i32, i32) {
    %c0_i32 = arith.constant 0 : i32
    %c0_i32_0 = arith.constant 0 : i32
    %c0_i32_1 = arith.constant 0 : i32
    return %c0_i32, %c0_i32_0 : i32, i32
  }
  func.func @transform_3(%arg0: i32) -> (i32, i32) {
    %c0_i32 = arith.constant 0 : i32
    %c0_i32_0 = arith.constant 0 : i32
    %c0_i32_1 = arith.constant 0 : i32
    return %c0_i32, %c0_i32_0 : i32, i32
  }
  func.func @transform_4(%arg0: i32) -> (i32, i32) {
    %c0_i32 = arith.constant 0 : i32
    %c0_i32_0 = arith.constant 0 : i32
    %c0_i32_1 = arith.constant 0 : i32
    return %c0_i32, %c0_i32_0 : i32, i32
  }
  func.func @transform_5(%arg0: i32) -> (i32, i32) {
    %c0_i32 = arith.constant 0 : i32
    %c0_i32_0 = arith.constant 0 : i32
    %c0_i32_1 = arith.constant 0 : i32
    return %c0_i32, %c0_i32_0 : i32, i32
  }
  func.func @transform_6(%arg0: i32) -> (i32, i32) {
    %c0_i32 = arith.constant 0 : i32
    %c0_i32_0 = arith.constant 0 : i32
    %c0_i32_1 = arith.constant 0 : i32
    return %c0_i32, %c0_i32_0 : i32, i32
  }
  func.func @transform_7(%arg0: i32) -> (i32, i32) {
    %c0_i32 = arith.constant 0 : i32
    %c0_i32_0 = arith.constant 0 : i32
    %c0_i32_1 = arith.constant 0 : i32
    return %c0_i32, %c0_i32_0 : i32, i32
  }
  func.func @transform_8(%arg0: i32) -> (i32, i32) {
    %c0_i32 = arith.constant 0 : i32
    %c0_i32_0 = arith.constant 0 : i32
    %c0_i32_1 = arith.constant 0 : i32
    return %c0_i32, %c0_i32_0 : i32, i32
  }
  func.func @transform_9(%arg0: i32) -> (i32, i32) {
    %c0_i32 = arith.constant 0 : i32
    %c0_i32_0 = arith.constant 0 : i32
    %c0_i32_1 = arith.constant 0 : i32
    return %c0_i32, %c0_i32_0 : i32, i32
  }
  func.func @transform_10(%arg0: i32) -> (i32, i32) {
    %c0_i32 = arith.constant 0 : i32
    %c0_i32_0 = arith.constant 0 : i32
    %c0_i32_1 = arith.constant 0 : i32
    return %c0_i32, %c0_i32_0 : i32, i32
  }
  func.func @transform_11(%arg0: i32) -> (i32, i32) {
    %c0_i32 = arith.constant 0 : i32
    %c0_i32_0 = arith.constant 0 : i32
    %c0_i32_1 = arith.constant 0 : i32
    return %c0_i32, %c0_i32_0 : i32, i32
  }
  func.func @transform_12(%arg0: i32) -> (i32, i32) {
    %c0_i32 = arith.constant 0 : i32
    %c0_i32_0 = arith.constant 0 : i32
    %c0_i32_1 = arith.constant 0 : i32
    return %c0_i32, %c0_i32_0 : i32, i32
  }
  func.func @transform_13(%arg0: i32) -> (i32, i32) {
    %c0_i32 = arith.constant 0 : i32
    %c0_i32_0 = arith.constant 0 : i32
    %c0_i32_1 = arith.constant 0 : i32
    return %c0_i32, %c0_i32_0 : i32, i32
  }
  func.func @transform_14(%arg0: i32) -> (i32, i32) {
    %c0_i32 = arith.constant 0 : i32
    %c0_i32_0 = arith.constant 0 : i32
    return %arg0, %c0_i32 : i32, i32
  }
}

</mosaic_0001>

<llo_original>
// kernel: tpu_custom_call.1
$region0: #{tpu_custom_call.1}
  #allocation0 [shape = 'u32[]', space=smem, size = 0x4, offset = 0x4, fixed_abs, tag = 'smem constant byte address 0x4 - core index']
  #allocation1 [shape = 'u32[144,128]{1,0:T(1,128)}', space=vmem, size = 0x12000, scoped, tag = 'internal scratch']
  #allocation2 [shape = 'f32[1,1]{1,0:T(1,128)S(6)}', space=smem, size = 0x200, scoped, tag = 'scoped memory for tpu_custom_call.1']
  %s0 = inlined_call_operand.<no memory space> [shape: f32[1,1], index: 0, kind: input, shape index: {}]
  %s1 = inlined_call_operand.vmem [shape: f32[256,128], index: 1, kind: input, shape index: {}]
  %s2 = inlined_call_operand.vmem [shape: f32[128,32], index: 2, kind: input, shape index: {}]
  %s3 = inlined_call_operand.vmem [shape: f32[1,32], index: 3, kind: input, shape index: {}]
  %s4 = inlined_call_operand.vmem [shape: f32[32,32], index: 4, kind: input, shape index: {}]
  %s5 = inlined_call_operand.vmem [shape: f32[1,32], index: 5, kind: input, shape index: {}]
  %s6 = inlined_call_operand.hbm [shape: f32[32,128], index: 6, kind: input, shape index: {}]
  %s7 = inlined_call_operand.hbm [shape: f32[1,128], index: 7, kind: input, shape index: {}]
  %s8 = inlined_call_operand.vmem [shape: f32[128,32], index: 8, kind: input, shape index: {}]
  %s9 = inlined_call_operand.hbm [shape: f32[1,32], index: 9, kind: input, shape index: {}]
  %s10 = inlined_call_operand.vmem [shape: f32[32,32], index: 10, kind: input, shape index: {}]
  %s11 = inlined_call_operand.vmem [shape: f32[1,32], index: 11, kind: input, shape index: {}]
  %s12 = inlined_call_operand.hbm [shape: f32[32,128], index: 12, kind: input, shape index: {}]
  %s13 = inlined_call_operand.vmem [shape: f32[1,128], index: 13, kind: input, shape index: {}]
  %s14 = inlined_call_operand.hbm [shape: f32[256,128], index: 14, kind: output, shape index: {}]
  %s15 = sld [smem:[#allocation0]]
  $region105: #{tpu_custom_call.1} parent=0
    _
  %s17 = ssub.s32 1, %s15
  %s18 = scalar_select 0, %s17, %s15
  %19 = sst [smem:[#allocation2]] %s0
  $region1: #{tpu_custom_call.1} parent=0
    #allocation3 [shape = 'u8[16384]{0}', space=vmem, size = 0x4000, scoped, tag = 'input window, operand 6, single buffered']
    #allocation4 [shape = 's32[2]{0}', space=sflag, size = 0x8, scoped, tag = 'scoped memory for tpu_custom_call.1']
    #allocation5 [shape = 's32[2]{0}', space=sflag, size = 0x8, scoped, tag = 'scoped memory for tpu_custom_call.1']
    #allocation6 [shape = 'u8[512]{0}', space=vmem, size = 0x400, scoped, tag = 'input window, operand 7, single buffered']
    #allocation7 [shape = 's32[1]{0}', space=sflag, size = 0x4, scoped, tag = 'scoped memory for tpu_custom_call.1']
    #allocation8 [shape = 'u8[512]{0}', space=vmem, size = 0x400, scoped, tag = 'input window, operand 9, single buffered']
    #allocation9 [shape = 'u8[16384]{0}', space=vmem, size = 0x4000, scoped, tag = 'input window, operand 12, single buffered']
    #allocation10 [shape = 's32[1]{0}', space=sflag, size = 0x4, scoped, tag = 'scoped memory for tpu_custom_call.1']
    #allocation11 [shape = 'u8[131072]{0}', space=vmem, size = 0x20000, scoped, tag = 'output window, operand 0']
    %20 = vsyncpa [#allocation4], 0
    %21 = vsyncpa [#allocation7], 0
    %22 = vsyncpa [#allocation10], 0
    %23 = vsyncpa [#allocation5], 0
    %s24 = scalar_lea.sflag [#allocation5], 1
    %25 = vsyncpa %s24, 0
    loop: start=0, step=1, limit=4
    $region2: #{tpu_custom_call.1} parent=1 // loop_pre_header
      _
    $region3: #{tpu_custom_call.1} parent=1 // loop_header
      %s27 = sphi 0, %s31
      %p28 = scmp.ge.s32.totalorder %s27, 4
      %s35 = sphi 0, %s35
      %s37 = sphi 0, %s35
      %s38 = sphi 0, %s37
      %s52 = sphi 0, %s38
      %s58 = sphi 0, %s60
      %s61 = sphi 0, %s58
      %s62 = sphi 0, %s61
      %s78 = sphi 0, %s62
      %s82 = sphi 0, %s82
      %s84 = sphi 0, %s82
      %s85 = sphi 0, %s84
      %s99 = sphi 0, %s85
      %s103 = sphi 0, %s103
      %s105 = sphi 0, %s103
      %s106 = sphi 0, %s105
      %s120 = sphi 0, %s106
      %s124 = sphi 0, %s124
      %s126 = sphi 0, %s124
      %s127 = sphi 0, %s126
      %s141 = sphi 0, %s127
      %s145 = sphi 0, %s145
      %s147 = sphi 0, %s145
      %s148 = sphi 0, %s147
      %s162 = sphi 0, %s148
      %s166 = sphi 0, %s166
      %s168 = sphi 0, %s166
      %s169 = sphi 0, %s168
      %s183 = sphi 0, %s169
      %s187 = sphi 0, %s187
      %s189 = sphi 0, %s187
      %s190 = sphi 0, %s189
      %s204 = sphi 0, %s190
      %s208 = sphi 0, %s208
      %s210 = sphi 0, %s208
      %s211 = sphi 0, %s210
      %s225 = sphi 0, %s211
      %s229 = sphi 0, %s229
      %s231 = sphi 0, %s229
      %s232 = sphi 0, %s231
      %s246 = sphi 0, %s232
      %s250 = sphi 0, %s250
      %s252 = sphi 0, %s250
      %s253 = sphi 0, %s252
      %s267 = sphi 0, %s253
      %s271 = sphi 0, %s271
      %s273 = sphi 0, %s271
      %s274 = sphi 0, %s273
      %s288 = sphi 0, %s274
      %s292 = sphi 0, %s292
      %s294 = sphi 0, %s292
      %s295 = sphi 0, %s294
      %s309 = sphi 0, %s295
      %s313 = sphi 0, %s313
      %s315 = sphi 0, %s313
      %s316 = sphi 0, %s315
      %s330 = sphi 0, %s316
      %s336 = sphi 0, %s338
      %s339 = sphi 0, %s336
      %s340 = sphi 0, %s339
      %s356 = sphi 0, %s340
    $region4: #{tpu_custom_call.1} parent=1 // loop_header_branch
      %30 = sbr.rel (%p28) target = $region8
    $region5: #{tpu_custom_call.1} parent=1 // loop_body
      %s32 = ssub.s32 %s27, 1
      %s33 = ssub.s32 %s27, 2
      %s34 = sadd.s32 %s27, 1
      %s36 = sadd.s32 %s35, 1
      %p39 = scmp.eq.s32.totalorder %s27, 1
      %p40 = scmp.ne.s32.totalorder %s35, %s37
      %p41 = scmp.eq.s32.totalorder %s27, 0
      %p42 = por %p40, %p41
      %p43 = scmp.ne.s32.totalorder %s35, %s37
      %p44 = scmp.eq.s32.totalorder %s32, 1
      %p45 = por %p43, %p44
      %p46 = scmp.ne.s32.totalorder %s37, %s38
      %p47 = scmp.eq.s32.totalorder %s32, 0
      %p48 = por %p46, %p47
      %p49 = scmp.ne.s32.totalorder %s37, %s38
      %p50 = scmp.eq.s32.totalorder %s33, 1
      %p51 = por %p49, %p50
      %p53 = scmp.ne.s32.totalorder %s38, %s52
      %p54 = scmp.eq.s32.totalorder %s33, 0
      %p55 = por %p53, %p54
      %s56 = ssub.s32 %s27, %s34
      %p57 = scmp.eq.s32.totalorder %s56, 0
      %s59 = sadd.s32 %s58, 1
      %s60 = scalar_select %p57, %s58, %s59
      %p63 = pneg %p57
      %p64 = scmp.eq.s32.totalorder %s27, 1
      %p65 = por %p63, %p64
      %p66 = scmp.ne.s32.totalorder %s58, %s61
      %p67 = scmp.eq.s32.totalorder %s27, 0
      %p68 = por %p66, %p67
      %p69 = scmp.ne.s32.totalorder %s58, %s61
      %p70 = scmp.eq.s32.totalorder %s32, 1
      %p71 = por %p69, %p70
      %p72 = scmp.ne.s32.totalorder %s61, %s62
      %p73 = scmp.eq.s32.totalorder %s32, 0
      %p74 = por %p72, %p73
      %p75 = scmp.ne.s32.totalorder %s61, %s62
      %p76 = scmp.eq.s32.totalorder %s33, 1
      %p77 = por %p75, %p76
      %p79 = scmp.ne.s32.totalorder %s62, %s78
      %p80 = scmp.eq.s32.totalorder %s33, 0
      %p81 = por %p79, %p80
      %s83 = sadd.s32 %s82, 1
      %p86 = scmp.eq.s32.totalorder %s27, 1
      %p87 = scmp.ne.s32.totalorder %s82, %s84
      %p88 = scmp.eq.s32.totalorder %s27, 0
      %p89 = por %p87, %p88
      %p90 = scmp.ne.s32.totalorder %s82, %s84
      %p91 = scmp.eq.s32.totalorder %s32, 1
      %p92 = por %p90, %p91
      %p93 = scmp.ne.s32.totalorder %s84, %s85
      %p94 = scmp.eq.s32.totalorder %s32, 0
      %p95 = por %p93, %p94
      %p96 = scmp.ne.s32.totalorder %s84, %s85
      %p97 = scmp.eq.s32.totalorder %s33, 1
      %p98 = por %p96, %p97
      %p100 = scmp.ne.s32.totalorder %s85, %s99
      %p101 = scmp.eq.s32.totalorder %s33, 0
      %p102 = por %p100, %p101
      %s104 = sadd.s32 %s103, 1
      %p107 = scmp.eq.s32.totalorder %s27, 1
      %p108 = scmp.ne.s32.totalorder %s103, %s105
      %p109 = scmp.eq.s32.totalorder %s27, 0
      %p110 = por %p108, %p109
      %p111 = scmp.ne.s32.totalorder %s103, %s105
      %p112 = scmp.eq.s32.totalorder %s32, 1
      %p113 = por %p111, %p112
      %p114 = scmp.ne.s32.totalorder %s105, %s106
      %p115 = scmp.eq.s32.totalorder %s32, 0
      %p116 = por %p114, %p115
      %p117 = scmp.ne.s32.totalorder %s105, %s106
      %p118 = scmp.eq.s32.totalorder %s33, 1
      %p119 = por %p117, %p118
      %p121 = scmp.ne.s32.totalorder %s106, %s120
      %p122 = scmp.eq.s32.totalorder %s33, 0
      %p123 = por %p121, %p122
      %s125 = sadd.s32 %s124, 1
      %p128 = scmp.eq.s32.totalorder %s27, 1
      %p129 = scmp.ne.s32.totalorder %s124, %s126
      %p130 = scmp.eq.s32.totalorder %s27, 0
      %p131 = por %p129, %p130
      %p132 = scmp.ne.s32.totalorder %s124, %s126
      %p133 = scmp.eq.s32.totalorder %s32, 1
      %p134 = por %p132, %p133
      %p135 = scmp.ne.s32.totalorder %s126, %s127
      %p136 = scmp.eq.s32.totalorder %s32, 0
      %p137 = por %p135, %p136
      %p138 = scmp.ne.s32.totalorder %s126, %s127
      %p139 = scmp.eq.s32.totalorder %s33, 1
      %p140 = por %p138, %p139
      %p142 = scmp.ne.s32.totalorder %s127, %s141
      %p143 = scmp.eq.s32.totalorder %s33, 0
      %p144 = por %p142, %p143
      %s146 = sadd.s32 %s145, 1
      %p149 = scmp.eq.s32.totalorder %s27, 1
      %p150 = scmp.ne.s32.totalorder %s145, %s147
      %p151 = scmp.eq.s32.totalorder %s27, 0
      %p152 = por %p150, %p151
      %p153 = scmp.ne.s32.totalorder %s145, %s147
      %p154 = scmp.eq.s32.totalorder %s32, 1
      %p155 = por %p153, %p154
      %p156 = scmp.ne.s32.totalorder %s147, %s148
      %p157 = scmp.eq.s32.totalorder %s32, 0
      %p158 = por %p156, %p157
      %p159 = scmp.ne.s32.totalorder %s147, %s148
      %p160 = scmp.eq.s32.totalorder %s33, 1
      %p161 = por %p159, %p160
      %p163 = scmp.ne.s32.totalorder %s148, %s162
      %p164 = scmp.eq.s32.totalorder %s33, 0
      %p165 = por %p163, %p164
      %s167 = sadd.s32 %s166, 1
      %p170 = scmp.eq.s32.totalorder %s27, 1
      %p171 = scmp.ne.s32.totalorder %s166, %s168
      %p172 = scmp.eq.s32.totalorder %s27, 0
      %p173 = por %p171, %p172
      %p174 = scmp.ne.s32.totalorder %s166, %s168
      %p175 = scmp.eq.s32.totalorder %s32, 1
      %p176 = por %p174, %p175
      %p177 = scmp.ne.s32.totalorder %s168, %s169
      %p178 = scmp.eq.s32.totalorder %s32, 0
      %p179 = por %p177, %p178
      %p180 = scmp.ne.s32.totalorder %s168, %s169
      %p181 = scmp.eq.s32.totalorder %s33, 1
      %p182 = por %p180, %p181
      %p184 = scmp.ne.s32.totalorder %s169, %s183
      %p185 = scmp.eq.s32.totalorder %s33, 0
      %p186 = por %p184, %p185
      %s188 = sadd.s32 %s187, 1
      %p191 = scmp.eq.s32.totalorder %s27, 1
      %p192 = scmp.ne.s32.totalorder %s187, %s189
      %p193 = scmp.eq.s32.totalorder %s27, 0
      %p194 = por %p192, %p193
      %p195 = scmp.ne.s32.totalorder %s187, %s189
      %p196 = scmp.eq.s32.totalorder %s32, 1
      %p197 = por %p195, %p196
      %p198 = scmp.ne.s32.totalorder %s189, %s190
      %p199 = scmp.eq.s32.totalorder %s32, 0
      %p200 = por %p198, %p199
      %p201 = scmp.ne.s32.totalorder %s189, %s190
      %p202 = scmp.eq.s32.totalorder %s33, 1
      %p203 = por %p201, %p202
      %p205 = scmp.ne.s32.totalorder %s190, %s204
      %p206 = scmp.eq.s32.totalorder %s33, 0
      %p207 = por %p205, %p206
      %s209 = sadd.s32 %s208, 1
      %p212 = scmp.eq.s32.totalorder %s27, 1
      %p213 = scmp.ne.s32.totalorder %s208, %s210
      %p214 = scmp.eq.s32.totalorder %s27, 0
      %p215 = por %p213, %p214
      %p216 = scmp.ne.s32.totalorder %s208, %s210
      %p217 = scmp.eq.s32.totalorder %s32, 1
      %p218 = por %p216, %p217
      %p219 = scmp.ne.s32.totalorder %s210, %s211
      %p220 = scmp.eq.s32.totalorder %s32, 0
      %p221 = por %p219, %p220
      %p222 = scmp.ne.s32.totalorder %s210, %s211
      %p223 = scmp.eq.s32.totalorder %s33, 1
      %p224 = por %p222, %p223
      %p226 = scmp.ne.s32.totalorder %s211, %s225
      %p227 = scmp.eq.s32.totalorder %s33, 0
      %p228 = por %p226, %p227
      %s230 = sadd.s32 %s229, 1
      %p233 = scmp.eq.s32.totalorder %s27, 1
      %p234 = scmp.ne.s32.totalorder %s229, %s231
      %p235 = scmp.eq.s32.totalorder %s27, 0
      %p236 = por %p234, %p235
      %p237 = scmp.ne.s32.totalorder %s229, %s231
      %p238 = scmp.eq.s32.totalorder %s32, 1
      %p239 = por %p237, %p238
      %p240 = scmp.ne.s32.totalorder %s231, %s232
      %p241 = scmp.eq.s32.totalorder %s32, 0
      %p242 = por %p240, %p241
      %p243 = scmp.ne.s32.totalorder %s231, %s232
      %p244 = scmp.eq.s32.totalorder %s33, 1
      %p245 = por %p243, %p244
      %p247 = scmp.ne.s32.totalorder %s232, %s246
      %p248 = scmp.eq.s32.totalorder %s33, 0
      %p249 = por %p247, %p248
      %s251 = sadd.s32 %s250, 1
      %p254 = scmp.eq.s32.totalorder %s27, 1
      %p255 = scmp.ne.s32.totalorder %s250, %s252
      %p256 = scmp.eq.s32.totalorder %s27, 0
      %p257 = por %p255, %p256
      %p258 = scmp.ne.s32.totalorder %s250, %s252
      %p259 = scmp.eq.s32.totalorder %s32, 1
      %p260 = por %p258, %p259
      %p261 = scmp.ne.s32.totalorder %s252, %s253
      %p262 = scmp.eq.s32.totalorder %s32, 0
      %p263 = por %p261, %p262
      %p264 = scmp.ne.s32.totalorder %s252, %s253
      %p265 = scmp.eq.s32.totalorder %s33, 1
      %p266 = por %p264, %p265
      %p268 = scmp.ne.s32.totalorder %s253, %s267
      %p269 = scmp.eq.s32.totalorder %s33, 0
      %p270 = por %p268, %p269
      %s272 = sadd.s32 %s271, 1
      %p275 = scmp.eq.s32.totalorder %s27, 1
      %p276 = scmp.ne.s32.totalorder %s271, %s273
      %p277 = scmp.eq.s32.totalorder %s27, 0
      %p278 = por %p276, %p277
      %p279 = scmp.ne.s32.totalorder %s271, %s273
      %p280 = scmp.eq.s32.totalorder %s32, 1
      %p281 = por %p279, %p280
      %p282 = scmp.ne.s32.totalorder %s273, %s274
      %p283 = scmp.eq.s32.totalorder %s32, 0
      %p284 = por %p282, %p283
      %p285 = scmp.ne.s32.totalorder %s273, %s274
      %p286 = scmp.eq.s32.totalorder %s33, 1
      %p287 = por %p285, %p286
      %p289 = scmp.ne.s32.totalorder %s274, %s288
      %p290 = scmp.eq.s32.totalorder %s33, 0
      %p291 = por %p289, %p290
      %s293 = sadd.s32 %s292, 1
      %p296 = scmp.eq.s32.totalorder %s27, 1
      %p297 = scmp.ne.s32.totalorder %s292, %s294
      %p298 = scmp.eq.s32.totalorder %s27, 0
      %p299 = por %p297, %p298
      %p300 = scmp.ne.s32.totalorder %s292, %s294
      %p301 = scmp.eq.s32.totalorder %s32, 1
      %p302 = por %p300, %p301
      %p303 = scmp.ne.s32.totalorder %s294, %s295
      %p304 = scmp.eq.s32.totalorder %s32, 0
      %p305 = por %p303, %p304
      %p306 = scmp.ne.s32.totalorder %s294, %s295
      %p307 = scmp.eq.s32.totalorder %s33, 1
      %p308 = por %p306, %p307
      %p310 = scmp.ne.s32.totalorder %s295, %s309
      %p311 = scmp.eq.s32.totalorder %s33, 0
      %p312 = por %p310, %p311
      %s314 = sadd.s32 %s313, 1
      %p317 = scmp.eq.s32.totalorder %s27, 1
      %p318 = scmp.ne.s32.totalorder %s313, %s315
      %p319 = scmp.eq.s32.totalorder %s27, 0
      %p320 = por %p318, %p319
      %p321 = scmp.ne.s32.totalorder %s313, %s315
      %p322 = scmp.eq.s32.totalorder %s32, 1
      %p323 = por %p321, %p322
      %p324 = scmp.ne.s32.totalorder %s315, %s316
      %p325 = scmp.eq.s32.totalorder %s32, 0
      %p326 = por %p324, %p325
      %p327 = scmp.ne.s32.totalorder %s315, %s316
      %p328 = scmp.eq.s32.totalorder %s33, 1
      %p329 = por %p327, %p328
      %p331 = scmp.ne.s32.totalorder %s316, %s330
      %p332 = scmp.eq.s32.totalorder %s33, 0
      %p333 = por %p331, %p332
      %s334 = ssub.s32 %s27, %s34
      %p335 = scmp.eq.s32.totalorder %s334, 0
      %s337 = sadd.s32 %s336, 1
      %s338 = scalar_select %p335, %s336, %s337
      %p341 = pneg %p335
      %p342 = scmp.eq.s32.totalorder %s27, 1
      %p343 = por %p341, %p342
      %p344 = scmp.ne.s32.totalorder %s336, %s339
      %p345 = scmp.eq.s32.totalorder %s27, 0
      %p346 = por %p344, %p345
      %p347 = scmp.ne.s32.totalorder %s336, %s339
      %p348 = scmp.eq.s32.totalorder %s32, 1
      %p349 = por %p347, %p348
      %p350 = scmp.ne.s32.totalorder %s339, %s340
      %p351 = scmp.eq.s32.totalorder %s32, 0
      %p352 = por %p350, %p351
      %p353 = scmp.ne.s32.totalorder %s339, %s340
      %p354 = scmp.eq.s32.totalorder %s33, 1
      %p355 = por %p353, %p354
      %p357 = scmp.ne.s32.totalorder %s340, %s356
      %p358 = scmp.eq.s32.totalorder %s33, 0
      %p359 = por %p357, %p358
      %p360 = scmp.le.s32.totalorder 1, %s27
      %p361 = scmp.lt.s32.totalorder %s27, 3
      %p362 = pnand %p360, %p361
      %p363 = pneg %p362
      // Predicated region
      $region9: #{tpu_custom_call.1} parent=5 // pred_check
        _
      $region10: #{tpu_custom_call.1} parent=5 // pred_check_branch
        %365 = sbr.rel (%p362) target = $region12
      $region11: #{tpu_custom_call.1} parent=5 // pred_region
        %s366 = ssub.s32 %s27, 1
        // Predicated region
        $region13: #{tpu_custom_call.1} parent=11 // pred_check
          %p367 = pneg %p48
        $region14: #{tpu_custom_call.1} parent=11 // pred_check_branch
          %369 = sbr.rel (%p367) target = $region16
        $region15: #{tpu_custom_call.1} parent=11 // pred_region
          _
        $region16: #{tpu_custom_call.1} parent=11 // pred_fallthru
          _
        // Predicated region
        $region17: #{tpu_custom_call.1} parent=11 // pred_check
          %p370 = pneg %p95
        $region18: #{tpu_custom_call.1} parent=11 // pred_check_branch
          %372 = sbr.rel (%p370) target = $region20
        $region19: #{tpu_custom_call.1} parent=11 // pred_region
          _
        $region20: #{tpu_custom_call.1} parent=11 // pred_fallthru
          _
        // Predicated region
        $region21: #{tpu_custom_call.1} parent=11 // pred_check
          %p373 = pneg %p116
        $region22: #{tpu_custom_call.1} parent=11 // pred_check_branch
          %375 = sbr.rel (%p373) target = $region24
        $region23: #{tpu_custom_call.1} parent=11 // pred_region
          _
        $region24: #{tpu_custom_call.1} parent=11 // pred_fallthru
          _
        // Predicated region
        $region25: #{tpu_custom_call.1} parent=11 // pred_check
          %p376 = pneg %p137
        $region26: #{tpu_custom_call.1} parent=11 // pred_check_branch
          %378 = sbr.rel (%p376) target = $region28
        $region27: #{tpu_custom_call.1} parent=11 // pred_region
          _
        $region28: #{tpu_custom_call.1} parent=11 // pred_fallthru
          _
        // Predicated region
        $region29: #{tpu_custom_call.1} parent=11 // pred_check
          %p379 = pneg %p158
        $region30: #{tpu_custom_call.1} parent=11 // pred_check_branch
          %381 = sbr.rel (%p379) target = $region32
        $region31: #{tpu_custom_call.1} parent=11 // pred_region
          _
        $region32: #{tpu_custom_call.1} parent=11 // pred_fallthru
          _
        // Predicated region
        $region33: #{tpu_custom_call.1} parent=11 // pred_check
          %p382 = pneg %p179
        $region34: #{tpu_custom_call.1} parent=11 // pred_check_branch
          %384 = sbr.rel (%p382) target = $region36
        $region35: #{tpu_custom_call.1} parent=11 // pred_region
          %s386 = ssub.s32 512, 512
          %387 = vsyncadd [#allocation4], %s386
          %s388 = sshll.u32 [#allocation3], 4
          %s389 = int_to_ptr.vmem [resolvable:$true] %s388
          %394 = dma.hbm_to_vmem [thread:$0]  %s6, 512, %s389, [#allocation4], 128, 128, 8
        $region36: #{tpu_custom_call.1} parent=11 // pred_fallthru
          _
        // Predicated region
        $region37: #{tpu_custom_call.1} parent=11 // pred_check
          %p395 = pneg %p200
        $region38: #{tpu_custom_call.1} parent=11 // pred_check_branch
          %397 = sbr.rel (%p395) target = $region40
        $region39: #{tpu_custom_call.1} parent=11 // pred_region
          %s399 = ssub.s32 16, 16
          %400 = vsyncadd [#allocation7], %s399
          %s402 = sshll.u32 [#allocation6], 4
          %s403 = int_to_ptr.vmem [resolvable:$true] %s402
          %405 = dma.hbm_to_vmem [thread:$0]  %s7, 16, %s403, [#allocation7]
        $region40: #{tpu_custom_call.1} parent=11 // pred_fallthru
          _
        // Predicated region
        $region41: #{tpu_custom_call.1} parent=11 // pred_check
          %p406 = pneg %p221
        $region42: #{tpu_custom_call.1} parent=11 // pred_check_branch
          %408 = sbr.rel (%p406) target = $region44
        $region43: #{tpu_custom_call.1} parent=11 // pred_region
          _
        $region44: #{tpu_custom_call.1} parent=11 // pred_fallthru
          _
        // Predicated region
        $region45: #{tpu_custom_call.1} parent=11 // pred_check
          %p409 = pneg %p242
        $region46: #{tpu_custom_call.1} parent=11 // pred_check_branch
          %411 = sbr.rel (%p409) target = $region48
        $region47: #{tpu_custom_call.1} parent=11 // pred_region
          %s413 = ssub.s32 16, 16
          %414 = vsyncadd [#allocation7], %s413
          %s416 = sshll.u32 [#allocation8], 4
          %s417 = int_to_ptr.vmem [resolvable:$true] %s416
          %419 = dma.hbm_to_vmem [thread:$0]  %s9, 16, %s417, [#allocation7]
        $region48: #{tpu_custom_call.1} parent=11 // pred_fallthru
          _
        // Predicated region
        $region49: #{tpu_custom_call.1} parent=11 // pred_check
          %p420 = pneg %p263
        $region50: #{tpu_custom_call.1} parent=11 // pred_check_branch
          %422 = sbr.rel (%p420) target = $region52
        $region51: #{tpu_custom_call.1} parent=11 // pred_region
          _
        $region52: #{tpu_custom_call.1} parent=11 // pred_fallthru
          _
        // Predicated region
        $region53: #{tpu_custom_call.1} parent=11 // pred_check
          %p423 = pneg %p284
        $region54: #{tpu_custom_call.1} parent=11 // pred_check_branch
          %425 = sbr.rel (%p423) target = $region56
        $region55: #{tpu_custom_call.1} parent=11 // pred_region
          _
        $region56: #{tpu_custom_call.1} parent=11 // pred_fallthru
          _
        // Predicated region
        $region57: #{tpu_custom_call.1} parent=11 // pred_check
          %p426 = pneg %p305
        $region58: #{tpu_custom_call.1} parent=11 // pred_check_branch
          %428 = sbr.rel (%p426) target = $region60
        $region59: #{tpu_custom_call.1} parent=11 // pred_region
          %s430 = ssub.s32 512, 512
          %431 = vsyncadd [#allocation10], %s430
          %s432 = sshll.u32 [#allocation9], 4
          %s433 = int_to_ptr.vmem [resolvable:$true] %s432
          %438 = dma.hbm_to_vmem [thread:$0]  %s12, 512, %s433, [#allocation10], 128, 128, 8
        $region60: #{tpu_custom_call.1} parent=11 // pred_fallthru
          _
        // Predicated region
        $region61: #{tpu_custom_call.1} parent=11 // pred_check
          %p439 = pneg %p326
        $region62: #{tpu_custom_call.1} parent=11 // pred_check_branch
          %441 = sbr.rel (%p439) target = $region64
        $region63: #{tpu_custom_call.1} parent=11 // pred_region
          _
        $region64: #{tpu_custom_call.1} parent=11 // pred_fallthru
          _
      $region12: #{tpu_custom_call.1} parent=5 // pred_fallthru
        _
      %p442 = scmp.lt.s32.totalorder %s27, 2
      // Predicated region
      $region65: #{tpu_custom_call.1} parent=5 // pred_check
        %p443 = pneg %p442
      $region66: #{tpu_custom_call.1} parent=5 // pred_check_branch
        %445 = sbr.rel (%p443) target = $region68
      $region67: #{tpu_custom_call.1} parent=5 // pred_region
        // Predicated region
        $region69: #{tpu_custom_call.1} parent=67 // pred_check
          %p446 = pneg %p68
        $region70: #{tpu_custom_call.1} parent=67 // pred_check_branch
          %448 = sbr.rel (%p446) target = $region72
        $region71: #{tpu_custom_call.1} parent=67 // pred_region
          %s449 = smul.u32 16, %s27
          %p450 = scmp.lt.s32.totalorder %s449, 31
          %s451 = scalar_select %p450, %s449, 31
          %s452 = smul.addr %s451, 8
          %s453 = scalar_lea.vmem %s1, %s452
          %s454 = smul.u32 16, %s27
        $region72: #{tpu_custom_call.1} parent=67 // pred_fallthru
          _
      $region68: #{tpu_custom_call.1} parent=5 // pred_fallthru
        _
      %p455 = scmp.le.s32.totalorder 1, %s27
      %p456 = scmp.lt.s32.totalorder %s27, 3
      %p457 = pnand %p455, %p456
      %p458 = pneg %p457
      // Predicated region
      $region73: #{tpu_custom_call.1} parent=5 // pred_check
        _
      $region74: #{tpu_custom_call.1} parent=5 // pred_check_branch
        %460 = sbr.rel (%p457) target = $region76
      $region75: #{tpu_custom_call.1} parent=5 // pred_region
        %s461 = ssub.s32 %s27, 1
        // Predicated region
        $region77: #{tpu_custom_call.1} parent=75 // pred_check
          %p462 = pneg %p179
        $region78: #{tpu_custom_call.1} parent=75 // pred_check_branch
          %464 = sbr.rel (%p462) target = $region80
        $region79: #{tpu_custom_call.1} parent=75 // pred_region
          %465 = dma.done [#allocation4], 512
        $region80: #{tpu_custom_call.1} parent=75 // pred_fallthru
          _
        // Predicated region
        $region81: #{tpu_custom_call.1} parent=75 // pred_check
          %p466 = pneg %p200
        $region82: #{tpu_custom_call.1} parent=75 // pred_check_branch
          %468 = sbr.rel (%p466) target = $region84
        $region83: #{tpu_custom_call.1} parent=75 // pred_region
          %469 = dma.done [#allocation7], 16
        $region84: #{tpu_custom_call.1} parent=75 // pred_fallthru
          _
        // Predicated region
        $region85: #{tpu_custom_call.1} parent=75 // pred_check
          %p470 = pneg %p242
        $region86: #{tpu_custom_call.1} parent=75 // pred_check_branch
          %472 = sbr.rel (%p470) target = $region88
        $region87: #{tpu_custom_call.1} parent=75 // pred_region
          %473 = dma.done [#allocation7], 16
        $region88: #{tpu_custom_call.1} parent=75 // pred_fallthru
          _
        // Predicated region
        $region89: #{tpu_custom_call.1} parent=75 // pred_check
          %p474 = pneg %p305
        $region90: #{tpu_custom_call.1} parent=75 // pred_check_branch
          %476 = sbr.rel (%p474) target = $region92
        $region91: #{tpu_custom_call.1} parent=75 // pred_region
          %477 = dma.done [#allocation10], 512
        $region92: #{tpu_custom_call.1} parent=75 // pred_fallthru
          _
        %p478 = pneg %p48
        %p479 = pneg %p45
        %s480 = smul.u32 16, %s32
        %p481 = scmp.lt.s32.totalorder %s480, 31
        %s482 = scalar_select %p481, %s480, 31
        %s483 = smul.addr %s482, 8
        %s484 = scalar_lea.vmem %s1, %s483
        %p485 = pneg %p74
        %p486 = pneg %p71
        %p487 = pneg %p95
        %p488 = pneg %p92
        %p489 = pneg %p116
        %p490 = pneg %p113
        %p491 = pneg %p137
        %p492 = pneg %p134
        %p493 = pneg %p158
        %p494 = pneg %p155
        %p495 = pneg %p179
        %p496 = pneg %p176
        %p497 = pneg %p200
        %p498 = pneg %p197
        %p499 = pneg %p221
        %p500 = pneg %p218
        %p501 = pneg %p242
        %p502 = pneg %p239
        %p503 = pneg %p263
        %p504 = pneg %p260
        %p505 = pneg %p284
        %p506 = pneg %p281
        %p507 = pneg %p305
        %p508 = pneg %p302
        %p509 = pneg %p326
        %p510 = pneg %p323
        %p511 = pneg %p352
        %p512 = pneg %p349
        %s513 = sand.u32 %s339, 1
        %s514 = scalar_lea.sflag [#allocation5], %s513
        %s515 = sand.u32 %s339, 1
        %s516 = smul.addr %s515, 128
        %s517 = scalar_lea.vmem [#allocation11], %s516
        %s518 = smul.u32 16, %s32
        %p519 = scmp.lt.s32.totalorder %s518, 31
        %s520 = scalar_select %p519, %s518, 31
        %s521 = smul.addr %s520, 8
        %s522 = scalar_lea.vmem %s1, %s521
        %s523 = smul.u32 16, %s32
        %s524 = smul.u32 16, %s32
        %s525 = sld [smem:[#allocation2]]
        %v526 = vld [vmem:[%s522] sm:$0xff]
        %v527 = vld [vmem:[%s522 + $0x8] sm:$0xff]
        %v528 = vld [vmem:[%s522 + $0x10] sm:$0xff]
        %v529 = vld [vmem:[%s522 + $0x18] sm:$0xff]
        %v530 = vld [vmem:[%s522 + $0x20] sm:$0xff]
        %v531 = vld [vmem:[%s522 + $0x28] sm:$0xff]
        %v532 = vld [vmem:[%s522 + $0x30] sm:$0xff]
        %v533 = vld [vmem:[%s522 + $0x38] sm:$0xff]
        %v534 = vld [vmem:[%s522 + $0x40] sm:$0xff]
        %v535 = vld [vmem:[%s522 + $0x48] sm:$0xff]
        %v536 = vld [vmem:[%s522 + $0x50] sm:$0xff]
        %v537 = vld [vmem:[%s522 + $0x58] sm:$0xff]
        %v538 = vld [vmem:[%s522 + $0x60] sm:$0xff]
        %v539 = vld [vmem:[%s522 + $0x68] sm:$0xff]
        %v540 = vld [vmem:[%s522 + $0x70] sm:$0xff]
        %v541 = vld [vmem:[%s522 + $0x78] sm:$0xff]
        %v542 = vlaneseq
        %v543 = vand.u32 %v542, 127
        %vm544 = vcmp.ge.s32.totalorder %v543, 32
        %vm545 = vcmp.lt.s32.totalorder %v543, 48
        %vm546 = vmand %vm544, %vm545
        %vm547 = vcmp.ge.s32.totalorder %v543, 96
        %vm548 = vcmp.lt.s32.totalorder %v543, 128
        %vm549 = vmand %vm547, %vm548
        %v550 = vld [vmem:[%s2] sm:$0xff]
        %v551 = vld [vmem:[%s2 + $0x8] sm:$0xff]
        %v552 = vld [vmem:[%s2 + $0x10] sm:$0xff]
        %v553 = vld [vmem:[%s2 + $0x18] sm:$0xff]
        %v554 = vld [vmem:[%s2 + $0x20] sm:$0xff]
        %v555 = vld [vmem:[%s2 + $0x28] sm:$0xff]
        %v556 = vld [vmem:[%s2 + $0x30] sm:$0xff]
        %v557 = vld [vmem:[%s2 + $0x38] sm:$0xff]
        %v558 = vld [vmem:[%s2 + $0x40] sm:$0xff]
        %v559 = vld [vmem:[%s2 + $0x48] sm:$0xff]
        %v560 = vld [vmem:[%s2 + $0x50] sm:$0xff]
        %v561 = vld [vmem:[%s2 + $0x58] sm:$0xff]
        %v562 = vld [vmem:[%s2 + $0x60] sm:$0xff]
        %v563 = vld [vmem:[%s2 + $0x68] sm:$0xff]
        %v564 = vld [vmem:[%s2 + $0x70] sm:$0xff]
        %v565 = vld [vmem:[%s2 + $0x78] sm:$0xff]
        %v566 = vld [vmem:[%s3] sm:$0x1]
        %v568 = vlaneseq
        %v569 = vshrl.u32 %v568, 7
        %v570 = vsub.s32 0, %v569
        %v571 = vrot.slane %v566, %v570
        %573 = vmatprep.subr.mxu0 0.0
        %574 = vmatpush1.msra.mxu0 %v550
        %575 = vmatprep.subr.mxu0 0.0
        %576 = vmatpush1.msra.mxu0 %v551
        %577 = vmatprep.subr.mxu0 0.0
        %578 = vmatpush1.msra.mxu0 %v552
        %579 = vmatprep.subr.mxu0 0.0
        %580 = vmatpush1.msra.mxu0 %v553
        %581 = vmatprep.subr.mxu0 0.0
        %582 = vmatpush1.msra.mxu0 %v554
        %583 = vmatprep.subr.mxu0 0.0
        %584 = vmatpush1.msra.mxu0 %v555
        %585 = vmatprep.subr.mxu0 0.0
        %586 = vmatpush1.msra.mxu0 %v556
        %587 = vmatprep.subr.mxu0 0.0
        %588 = vmatpush1.msra.mxu0 %v557
        %589 = vmatprep.subr.mxu0 0.0
        %590 = vmatpush1.msra.mxu0 %v558
        %591 = vmatprep.subr.mxu0 0.0
        %592 = vmatpush1.msra.mxu0 %v559
        %593 = vmatprep.subr.mxu0 0.0
        %594 = vmatpush1.msra.mxu0 %v560
        %595 = vmatprep.subr.mxu0 0.0
        %596 = vmatpush1.msra.mxu0 %v561
        %597 = vmatprep.subr.mxu0 0.0
        %598 = vmatpush1.msra.mxu0 %v562
        %599 = vmatprep.subr.mxu0 0.0
        %600 = vmatpush1.msra.mxu0 %v563
        %601 = vmatprep.subr.mxu0 0.0
        %602 = vmatpush1.msra.mxu0 %v564
        %603 = vmatprep.subr.mxu0 0.0
        %604 = vmatpush1.msra.mxu0 %v565
        %605 = vmatprep.subr.mxu0 0.0
        %606 = vmatpush1.msra.mxu0 0.0
        %607 = vmatprep.subr.mxu0 0.0
        %608 = vmatpush1.msra.mxu0 0.0
        %609 = vmatprep.subr.mxu0 0.0
        %610 = vmatpush1.msra.mxu0 0.0
        %611 = vmatprep.subr.mxu0 0.0
        %612 = vmatpush1.msra.mxu0 0.0
        %613 = vmatprep.subr.mxu0 0.0
        %614 = vmatpush1.msra.mxu0 0.0
        %615 = vmatprep.subr.mxu0 0.0
        %616 = vmatpush1.msra.mxu0 0.0
        %617 = vmatprep.subr.mxu0 0.0
        %618 = vmatpush1.msra.mxu0 0.0
        %619 = vmatprep.subr.mxu0 0.0
        %620 = vmatpush1.msra.mxu0 0.0
        %621 = vmatprep.subr.mxu0 0.0
        %622 = vmatpush1.msra.mxu0 0.0
        %623 = vmatprep.subr.mxu0 0.0
        %624 = vmatpush1.msra.mxu0 0.0
        %625 = vmatprep.subr.mxu0 0.0
        %626 = vmatpush1.msra.mxu0 0.0
        %627 = vmatprep.subr.mxu0 0.0
        %628 = vmatpush1.msra.mxu0 0.0
        %629 = vmatprep.subr.mxu0 0.0
        %630 = vmatpush1.msra.mxu0 0.0
        %631 = vmatprep.subr.mxu0 0.0
        %632 = vmatpush1.msra.mxu0 0.0
        %633 = vmatprep.subr.mxu0 0.0
        %634 = vmatpush1.msra.mxu0 0.0
        %635 = vmatprep.subr.mxu0 0.0
        %636 = vmatpush1.msra.mxu0 0.0
        %637 = vmatprep.mubr.f32.mxu0 0.0
        %638 = vmatmul.mubr.f32.gmra.mrb[0].mxu0 %v526
        %v639 = vpop.f32.mrb[0].mxu0
        %v640 = vadd.f32 %v571, %v639
        %v641 = vpop.f32.mrb[0].mxu0
        %642 = vmatprep.mubr.f32.mxu0 0.0
        %643 = vmatmul.mubr.f32.gmra.mrb[0].mxu0 %v527
        %v644 = vpop.f32.mrb[0].mxu0
        %v645 = vadd.f32 %v571, %v644
        %v646 = vpop.f32.mrb[0].mxu0
        %647 = vmatprep.mubr.f32.mxu0 0.0
        %648 = vmatmul.mubr.f32.gmra.mrb[0].mxu0 %v528
        %v649 = vpop.f32.mrb[0].mxu0
        %v650 = vadd.f32 %v571, %v649
        %v651 = vpop.f32.mrb[0].mxu0
        %652 = vmatprep.mubr.f32.mxu0 0.0
        %653 = vmatmul.mubr.f32.gmra.mrb[0].mxu0 %v529
        %v654 = vpop.f32.mrb[0].mxu0
        %v655 = vadd.f32 %v571, %v654
        %v656 = vpop.f32.mrb[0].mxu0
        %657 = vmatprep.mubr.f32.mxu0 0.0
        %658 = vmatmul.mubr.f32.gmra.mrb[0].mxu0 %v530
        %v659 = vpop.f32.mrb[0].mxu0
        %v660 = vadd.f32 %v571, %v659
        %v661 = vpop.f32.mrb[0].mxu0
        %662 = vmatprep.mubr.f32.mxu0 0.0
        %663 = vmatmul.mubr.f32.gmra.mrb[0].mxu0 %v531
        %v664 = vpop.f32.mrb[0].mxu0
        %v665 = vadd.f32 %v571, %v664
        %v666 = vpop.f32.mrb[0].mxu0
        %667 = vmatprep.mubr.f32.mxu0 0.0
        %668 = vmatmul.mubr.f32.gmra.mrb[0].mxu0 %v532
        %v669 = vpop.f32.mrb[0].mxu0
        %v670 = vadd.f32 %v571, %v669
        %v671 = vpop.f32.mrb[0].mxu0
        %672 = vmatprep.mubr.f32.mxu0 0.0
        %673 = vmatmul.mubr.f32.gmra.mrb[0].mxu0 %v533
        %v674 = vpop.f32.mrb[0].mxu0
        %v675 = vadd.f32 %v571, %v674
        %v676 = vpop.f32.mrb[0].mxu0
        %677 = vmatprep.mubr.f32.mxu0 0.0
        %678 = vmatmul.mubr.f32.gmra.mrb[0].mxu0 %v534
        %v679 = vpop.f32.mrb[0].mxu0
        %v680 = vadd.f32 %v571, %v679
        %v681 = vpop.f32.mrb[0].mxu0
        %682 = vmatprep.mubr.f32.mxu0 0.0
        %683 = vmatmul.mubr.f32.gmra.mrb[0].mxu0 %v535
        %v684 = vpop.f32.mrb[0].mxu0
        %v685 = vadd.f32 %v571, %v684
        %v686 = vpop.f32.mrb[0].mxu0
        %687 = vmatprep.mubr.f32.mxu0 0.0
        %688 = vmatmul.mubr.f32.gmra.mrb[0].mxu0 %v536
        %v689 = vpop.f32.mrb[0].mxu0
        %v690 = vadd.f32 %v571, %v689
        %v691 = vpop.f32.mrb[0].mxu0
        %692 = vmatprep.mubr.f32.mxu0 0.0
        %693 = vmatmul.mubr.f32.gmra.mrb[0].mxu0 %v537
        %v694 = vpop.f32.mrb[0].mxu0
        %v695 = vadd.f32 %v571, %v694
        %v696 = vpop.f32.mrb[0].mxu0
        %697 = vmatprep.mubr.f32.mxu0 0.0
        %698 = vmatmul.mubr.f32.gmra.mrb[0].mxu0 %v538
        %v699 = vpop.f32.mrb[0].mxu0
        %v700 = vadd.f32 %v571, %v699
        %v701 = vpop.f32.mrb[0].mxu0
        %702 = vmatprep.mubr.f32.mxu0 0.0
        %703 = vmatmul.mubr.f32.gmra.mrb[0].mxu0 %v539
        %v704 = vpop.f32.mrb[0].mxu0
        %v705 = vadd.f32 %v571, %v704
        %v706 = vpop.f32.mrb[0].mxu0
        %707 = vmatprep.mubr.f32.mxu0 0.0
        %708 = vmatmul.mubr.f32.gmra.mrb[0].mxu0 %v540
        %v709 = vpop.f32.mrb[0].mxu0
        %v710 = vadd.f32 %v571, %v709
        %v711 = vpop.f32.mrb[0].mxu0
        %712 = vmatprep.mubr.f32.mxu0 0.0
        %713 = vmatmul.mubr.f32.gmra.mrb[0].mxu0 %v541
        %v714 = vpop.f32.mrb[0].mxu0
        %v715 = vadd.f32 %v571, %v714
        %v716 = vpop.f32.mrb[0].mxu0
        %717 = vdwg.mxu0
        %vm718 = vcmp.gt.f32.partialorder %v640, 0.0
        %vm719 = vcmp.gt.f32.partialorder %v645, 0.0
        %vm720 = vcmp.gt.f32.partialorder %v650, 0.0
        %vm721 = vcmp.gt.f32.partialorder %v655, 0.0
        %vm722 = vcmp.gt.f32.partialorder %v660, 0.0
        %vm723 = vcmp.gt.f32.partialorder %v665, 0.0
        %vm724 = vcmp.gt.f32.partialorder %v670, 0.0
        %vm725 = vcmp.gt.f32.partialorder %v675, 0.0
        %vm726 = vcmp.gt.f32.partialorder %v680, 0.0
        %vm727 = vcmp.gt.f32.partialorder %v685, 0.0
        %vm728 = vcmp.gt.f32.partialorder %v690, 0.0
        %vm729 = vcmp.gt.f32.partialorder %v695, 0.0
        %vm730 = vcmp.gt.f32.partialorder %v700, 0.0
        %vm731 = vcmp.gt.f32.partialorder %v705, 0.0
        %vm732 = vcmp.gt.f32.partialorder %v710, 0.0
        %vm733 = vcmp.gt.f32.partialorder %v715, 0.0
        %v734 = vstv %s525
        %v735 = vmul.f32 %v734, %v640
        %v736 = vmul.f32 %v734, %v645
        %v737 = vmul.f32 %v734, %v650
        %v738 = vmul.f32 %v734, %v655
        %v739 = vmul.f32 %v734, %v660
        %v740 = vmul.f32 %v734, %v665
        %v741 = vmul.f32 %v734, %v670
        %v742 = vmul.f32 %v734, %v675
        %v743 = vmul.f32 %v734, %v680
        %v744 = vmul.f32 %v734, %v685
        %v745 = vmul.f32 %v734, %v690
        %v746 = vmul.f32 %v734, %v695
        %v747 = vmul.f32 %v734, %v700
        %v748 = vmul.f32 %v734, %v705
        %v749 = vmul.f32 %v734, %v710
        %v750 = vmul.f32 %v734, %v715
        %v751 = vsel %vm718, %v640, %v735
        %v752 = vsel %vm719, %v645, %v736
        %v753 = vsel %vm720, %v650, %v737
        %v754 = vsel %vm721, %v655, %v738
        %v755 = vsel %vm722, %v660, %v739
        %v756 = vsel %vm723, %v665, %v740
        %v757 = vsel %vm724, %v670, %v741
        %v758 = vsel %vm725, %v675, %v742
        %v759 = vsel %vm726, %v680, %v743
        %v760 = vsel %vm727, %v685, %v744
        %v761 = vsel %vm728, %v690, %v745
        %v762 = vsel %vm729, %v695, %v746
        %v763 = vsel %vm730, %v700, %v747
        %v764 = vsel %vm731, %v705, %v748
        %v765 = vsel %vm732, %v710, %v749
        %v766 = vsel %vm733, %v715, %v750
        %v767 = vld [vmem:[%s4] sm:$0xff]
        %v768 = vld [vmem:[%s4 + $0x8] sm:$0xff]
        %v769 = vld [vmem:[%s4 + $0x10] sm:$0xff]
        %v770 = vld [vmem:[%s4 + $0x18] sm:$0xff]
        %v771 = vld [vmem:[%s5] sm:$0x1]
        %v773 = vlaneseq
        %v774 = vshrl.u32 %v773, 7
        %v775 = vsub.s32 0, %v774
        %v776 = vrot.slane %v771, %v775
        %vm778 = vcmask 261120
        %v780 = vsel %vm778, %v751, 0
        %v783 = vsel %vm778, %v752, 0
        %v786 = vsel %vm778, %v753, 0
        %v789 = vsel %vm778, %v754, 0
        %v792 = vsel %vm778, %v755, 0
        %v795 = vsel %vm778, %v756, 0
        %v798 = vsel %vm778, %v757, 0
        %v801 = vsel %vm778, %v758, 0
        %v804 = vsel %vm778, %v759, 0
        %v807 = vsel %vm778, %v760, 0
        %v810 = vsel %vm778, %v761, 0
        %v813 = vsel %vm778, %v762, 0
        %v816 = vsel %vm778, %v763, 0
        %v819 = vsel %vm778, %v764, 0
        %v822 = vsel %vm778, %v765, 0
        %v825 = vsel %vm778, %v766, 0
        %827 = vmatprep.subr.mxu0 0.0
        %828 = vmatpush1.msra.mxu0 %v767
        %829 = vmatprep.subr.mxu0 0.0
        %830 = vmatpush1.msra.mxu0 %v768
        %831 = vmatprep.subr.mxu0 0.0
        %832 = vmatpush1.msra.mxu0 %v769
        %833 = vmatprep.subr.mxu0 0.0
        %834 = vmatpush1.msra.mxu0 %v770
        %835 = vmatprep.subr.mxu0 0.0
        %836 = vmatpush1.msra.mxu0 0.0
        %837 = vmatprep.subr.mxu0 0.0
        %838 = vmatpush1.msra.mxu0 0.0
        %839 = vmatprep.subr.mxu0 0.0
        %840 = vmatpush1.msra.mxu0 0.0
        %841 = vmatprep.subr.mxu0 0.0
        %842 = vmatpush1.msra.mxu0 0.0
        %843 = vmatprep.subr.mxu0 0.0
        %844 = vmatpush1.msra.mxu0 0.0
        %845 = vmatprep.subr.mxu0 0.0
        %846 = vmatpush1.msra.mxu0 0.0
        %847 = vmatprep.subr.mxu0 0.0
        %848 = vmatpush1.msra.mxu0 0.0
        %849 = vmatprep.subr.mxu0 0.0
        %850 = vmatpush1.msra.mxu0 0.0
        %851 = vmatprep.subr.mxu0 0.0
        %852 = vmatpush1.msra.mxu0 0.0
        %853 = vmatprep.subr.mxu0 0.0
        %854 = vmatpush1.msra.mxu0 0.0
        %855 = vmatprep.subr.mxu0 0.0
        %856 = vmatpush1.msra.mxu0 0.0
        %857 = vmatprep.subr.mxu0 0.0
        %858 = vmatpush1.msra.mxu0 0.0
        %859 = vmatprep.subr.mxu0 0.0
        %860 = vmatpush1.msra.mxu0 0.0
        %861 = vmatprep.subr.mxu0 0.0
        %862 = vmatpush1.msra.mxu0 0.0
        %863 = vmatprep.subr.mxu0 0.0
        %864 = vmatpush1.msra.mxu0 0.0
        %865 = vmatprep.subr.mxu0 0.0
        %866 = vmatpush1.msra.mxu0 0.0
        %867 = vmatprep.subr.mxu0 0.0
        %868 = vmatpush1.msra.mxu0 0.0
        %869 = vmatprep.subr.mxu0 0.0
        %870 = vmatpush1.msra.mxu0 0.0
        %871 = vmatprep.subr.mxu0 0.0
        %872 = vmatpush1.msra.mxu0 0.0
        %873 = vmatprep.subr.mxu0 0.0
        %874 = vmatpush1.msra.mxu0 0.0
        %875 = vmatprep.subr.mxu0 0.0
        %876 = vmatpush1.msra.mxu0 0.0
        %877 = vmatprep.subr.mxu0 0.0
        %878 = vmatpush1.msra.mxu0 0.0
        %879 = vmatprep.subr.mxu0 0.0
        %880 = vmatpush1.msra.mxu0 0.0
        %881 = vmatprep.subr.mxu0 0.0
        %882 = vmatpush1.msra.mxu0 0.0
        %883 = vmatprep.subr.mxu0 0.0
        %884 = vmatpush1.msra.mxu0 0.0
        %885 = vmatprep.subr.mxu0 0.0
        %886 = vmatpush1.msra.mxu0 0.0
        %887 = vmatprep.subr.mxu0 0.0
        %888 = vmatpush1.msra.mxu0 0.0
        %889 = vmatprep.subr.mxu0 0.0
        %890 = vmatpush1.msra.mxu0 0.0
        %891 = vmatprep.mubr.f32.mxu0 0.0
        %892 = vmatmul.mubr.f32.gmra.mrb[0].mxu0 %v780
        %v893 = vpop.f32.mrb[0].mxu0
        %v894 = vadd.f32 %v776, %v893
        %v895 = vpop.f32.mrb[0].mxu0
        %896 = vmatprep.mubr.f32.mxu0 0.0
        %897 = vmatmul.mubr.f32.gmra.mrb[0].mxu0 %v783
        %v898 = vpop.f32.mrb[0].mxu0
        %v899 = vadd.f32 %v776, %v898
        %v900 = vpop.f32.mrb[0].mxu0
        %901 = vmatprep.mubr.f32.mxu0 0.0
        %902 = vmatmul.mubr.f32.gmra.mrb[0].mxu0 %v786
        %v903 = vpop.f32.mrb[0].mxu0
        %v904 = vadd.f32 %v776, %v903
        %v905 = vpop.f32.mrb[0].mxu0
        %906 = vmatprep.mubr.f32.mxu0 0.0
        %907 = vmatmul.mubr.f32.gmra.mrb[0].mxu0 %v789
        %v908 = vpop.f32.mrb[0].mxu0
        %v909 = vadd.f32 %v776, %v908
        %v910 = vpop.f32.mrb[0].mxu0
        %911 = vmatprep.mubr.f32.mxu0 0.0
        %912 = vmatmul.mubr.f32.gmra.mrb[0].mxu0 %v792
        %v913 = vpop.f32.mrb[0].mxu0
        %v914 = vadd.f32 %v776, %v913
        %v915 = vpop.f32.mrb[0].mxu0
        %916 = vmatprep.mubr.f32.mxu0 0.0
        %917 = vmatmul.mubr.f32.gmra.mrb[0].mxu0 %v795
        %v918 = vpop.f32.mrb[0].mxu0
        %v919 = vadd.f32 %v776, %v918
        %v920 = vpop.f32.mrb[0].mxu0
        %921 = vmatprep.mubr.f32.mxu0 0.0
        %922 = vmatmul.mubr.f32.gmra.mrb[0].mxu0 %v798
        %v923 = vpop.f32.mrb[0].mxu0
        %v924 = vadd.f32 %v776, %v923
        %v925 = vpop.f32.mrb[0].mxu0
        %926 = vmatprep.mubr.f32.mxu0 0.0
        %927 = vmatmul.mubr.f32.gmra.mrb[0].mxu0 %v801
        %v928 = vpop.f32.mrb[0].mxu0
        %v929 = vadd.f32 %v776, %v928
        %v930 = vpop.f32.mrb[0].mxu0
        %931 = vmatprep.mubr.f32.mxu0 0.0
        %932 = vmatmul.mubr.f32.gmra.mrb[0].mxu0 %v804
        %v933 = vpop.f32.mrb[0].mxu0
        %v934 = vadd.f32 %v776, %v933
        %v935 = vpop.f32.mrb[0].mxu0
        %936 = vmatprep.mubr.f32.mxu0 0.0
        %937 = vmatmul.mubr.f32.gmra.mrb[0].mxu0 %v807
        %v938 = vpop.f32.mrb[0].mxu0
        %v939 = vadd.f32 %v776, %v938
        %v940 = vpop.f32.mrb[0].mxu0
        %941 = vmatprep.mubr.f32.mxu0 0.0
        %942 = vmatmul.mubr.f32.gmra.mrb[0].mxu0 %v810
        %v943 = vpop.f32.mrb[0].mxu0
        %v944 = vadd.f32 %v776, %v943
        %v945 = vpop.f32.mrb[0].mxu0
        %946 = vmatprep.mubr.f32.mxu0 0.0
        %947 = vmatmul.mubr.f32.gmra.mrb[0].mxu0 %v813
        %v948 = vpop.f32.mrb[0].mxu0
        %v949 = vadd.f32 %v776, %v948
        %v950 = vpop.f32.mrb[0].mxu0
        %951 = vmatprep.mubr.f32.mxu0 0.0
        %952 = vmatmul.mubr.f32.gmra.mrb[0].mxu0 %v816
        %v953 = vpop.f32.mrb[0].mxu0
        %v954 = vadd.f32 %v776, %v953
        %v955 = vpop.f32.mrb[0].mxu0
        %956 = vmatprep.mubr.f32.mxu0 0.0
        %957 = vmatmul.mubr.f32.gmra.mrb[0].mxu0 %v819
        %v958 = vpop.f32.mrb[0].mxu0
        %v959 = vadd.f32 %v776, %v958
        %v960 = vpop.f32.mrb[0].mxu0
        %961 = vmatprep.mubr.f32.mxu0 0.0
        %962 = vmatmul.mubr.f32.gmra.mrb[0].mxu0 %v822
        %v963 = vpop.f32.mrb[0].mxu0
        %v964 = vadd.f32 %v776, %v963
        %v965 = vpop.f32.mrb[0].mxu0
        %966 = vmatprep.mubr.f32.mxu0 0.0
        %967 = vmatmul.mubr.f32.gmra.mrb[0].mxu0 %v825
        %v968 = vpop.f32.mrb[0].mxu0
        %v969 = vadd.f32 %v776, %v968
        %v970 = vpop.f32.mrb[0].mxu0
        %971 = vdwg.mxu0
        %vm972 = vcmp.gt.f32.partialorder %v894, 0.0
        %vm973 = vcmp.gt.f32.partialorder %v899, 0.0
        %vm974 = vcmp.gt.f32.partialorder %v904, 0.0
        %vm975 = vcmp.gt.f32.partialorder %v909, 0.0
        %vm976 = vcmp.gt.f32.partialorder %v914, 0.0
        %vm977 = vcmp.gt.f32.partialorder %v919, 0.0
        %vm978 = vcmp.gt.f32.partialorder %v924, 0.0
        %vm979 = vcmp.gt.f32.partialorder %v929, 0.0
        %vm980 = vcmp.gt.f32.partialorder %v934, 0.0
        %vm981 = vcmp.gt.f32.partialorder %v939, 0.0
        %vm982 = vcmp.gt.f32.partialorder %v944, 0.0
        %vm983 = vcmp.gt.f32.partialorder %v949, 0.0
        %vm984 = vcmp.gt.f32.partialorder %v954, 0.0
        %vm985 = vcmp.gt.f32.partialorder %v959, 0.0
        %vm986 = vcmp.gt.f32.partialorder %v964, 0.0
        %vm987 = vcmp.gt.f32.partialorder %v969, 0.0
        %v988 = vmul.f32 %v734, %v894
        %v989 = vmul.f32 %v734, %v899
        %v990 = vmul.f32 %v734, %v904
        %v991 = vmul.f32 %v734, %v909
        %v992 = vmul.f32 %v734, %v914
        %v993 = vmul.f32 %v734, %v919
        %v994 = vmul.f32 %v734, %v924
        %v995 = vmul.f32 %v734, %v929
        %v996 = vmul.f32 %v734, %v934
        %v997 = vmul.f32 %v734, %v939
        %v998 = vmul.f32 %v734, %v944
        %v999 = vmul.f32 %v734, %v949
        %v1000 = vmul.f32 %v734, %v954
        %v1001 = vmul.f32 %v734, %v959
        %v1002 = vmul.f32 %v734, %v964
        %v1003 = vmul.f32 %v734, %v969
        %v1004 = vsel %vm972, %v894, %v988
        %v1005 = vsel %vm973, %v899, %v989
        %v1006 = vsel %vm974, %v904, %v990
        %v1007 = vsel %vm975, %v909, %v991
        %v1008 = vsel %vm976, %v914, %v992
        %v1009 = vsel %vm977, %v919, %v993
        %v1010 = vsel %vm978, %v924, %v994
        %v1011 = vsel %vm979, %v929, %v995
        %v1012 = vsel %vm980, %v934, %v996
        %v1013 = vsel %vm981, %v939, %v997
        %v1014 = vsel %vm982, %v944, %v998
        %v1015 = vsel %vm983, %v949, %v999
        %v1016 = vsel %vm984, %v954, %v1000
        %v1017 = vsel %vm985, %v959, %v1001
        %v1018 = vsel %vm986, %v964, %v1002
        %v1019 = vsel %vm987, %v969, %v1003
        %v1020 = vld [vmem:[#allocation3] sm:$0xff]
        %v1021 = vld [vmem:[#allocation3 + $0x8] sm:$0xff]
        %v1022 = vld [vmem:[#allocation3 + $0x10] sm:$0xff]
        %v1023 = vld [vmem:[#allocation3 + $0x18] sm:$0xff]
        %v1024 = vld [vmem:[#allocation6] sm:$0x1]
        %v1026 = vlaneseq
        %v1027 = vshrl.u32 %v1026, 7
        %v1028 = vsub.s32 0, %v1027
        %v1029 = vrot.slane %v1024, %v1028
        %v1032 = vsel %vm778, %v1004, 0
        %v1035 = vsel %vm778, %v1005, 0
        %v1038 = vsel %vm778, %v1006, 0
        %v1041 = vsel %vm778, %v1007, 0
        %v1044 = vsel %vm778, %v1008, 0
        %v1047 = vsel %vm778, %v1009, 0
        %v1050 = vsel %vm778, %v1010, 0
        %v1053 = vsel %vm778, %v1011, 0
        %v1056 = vsel %vm778, %v1012, 0
        %v1059 = vsel %vm778, %v1013, 0
        %v1062 = vsel %vm778, %v1014, 0
        %v1065 = vsel %vm778, %v1015, 0
        %v1068 = vsel %vm778, %v1016, 0
        %v1071 = vsel %vm778, %v1017, 0
        %v1074 = vsel %vm778, %v1018, 0
        %v1077 = vsel %vm778, %v1019, 0
        %1079 = vmatprep.subr.mxu0 0.0
        %1080 = vmatpush1.msra.mxu0 %v1020
        %1081 = vmatprep.subr.mxu0 0.0
        %1082 = vmatpush1.msra.mxu0 %v1021
        %1083 = vmatprep.subr.mxu0 0.0
        %1084 = vmatpush1.msra.mxu0 %v1022
        %1085 = vmatprep.subr.mxu0 0.0
        %1086 = vmatpush1.msra.mxu0 %v1023
        %1087 = vmatprep.subr.mxu0 0.0
        %1088 = vmatpush1.msra.mxu0 0.0
        %1089 = vmatprep.subr.mxu0 0.0
        %1090 = vmatpush1.msra.mxu0 0.0
        %1091 = vmatprep.subr.mxu0 0.0
        %1092 = vmatpush1.msra.mxu0 0.0
        %1093 = vmatprep.subr.mxu0 0.0
        %1094 = vmatpush1.msra.mxu0 0.0
        %1095 = vmatprep.subr.mxu0 0.0
        %1096 = vmatpush1.msra.mxu0 0.0
        %1097 = vmatprep.subr.mxu0 0.0
        %1098 = vmatpush1.msra.mxu0 0.0
        %1099 = vmatprep.subr.mxu0 0.0
        %1100 = vmatpush1.msra.mxu0 0.0
        %1101 = vmatprep.subr.mxu0 0.0
        %1102 = vmatpush1.msra.mxu0 0.0
        %1103 = vmatprep.subr.mxu0 0.0
        %1104 = vmatpush1.msra.mxu0 0.0
        %1105 = vmatprep.subr.mxu0 0.0
        %1106 = vmatpush1.msra.mxu0 0.0
        %1107 = vmatprep.subr.mxu0 0.0
        %1108 = vmatpush1.msra.mxu0 0.0
        %1109 = vmatprep.subr.mxu0 0.0
        %1110 = vmatpush1.msra.mxu0 0.0
        %1111 = vmatprep.subr.mxu0 0.0
        %1112 = vmatpush1.msra.mxu0 0.0
        %1113 = vmatprep.subr.mxu0 0.0
        %1114 = vmatpush1.msra.mxu0 0.0
        %1115 = vmatprep.subr.mxu0 0.0
        %1116 = vmatpush1.msra.mxu0 0.0
        %1117 = vmatprep.subr.mxu0 0.0
        %1118 = vmatpush1.msra.mxu0 0.0
        %1119 = vmatprep.subr.mxu0 0.0
        %1120 = vmatpush1.msra.mxu0 0.0
        %1121 = vmatprep.subr.mxu0 0.0
        %1122 = vmatpush1.msra.mxu0 0.0
        %1123 = vmatprep.subr.mxu0 0.0
        %1124 = vmatpush1.msra.mxu0 0.0
        %1125 = vmatprep.subr.mxu0 0.0
        %1126 = vmatpush1.msra.mxu0 0.0
        %1127 = vmatprep.subr.mxu0 0.0
        %1128 = vmatpush1.msra.mxu0 0.0
        %1129 = vmatprep.subr.mxu0 0.0
        %1130 = vmatpush1.msra.mxu0 0.0
        %1131 = vmatprep.subr.mxu0 0.0
        %1132 = vmatpush1.msra.mxu0 0.0
        %1133 = vmatprep.subr.mxu0 0.0
        %1134 = vmatpush1.msra.mxu0 0.0
        %1135 = vmatprep.subr.mxu0 0.0
        %1136 = vmatpush1.msra.mxu0 0.0
        %1137 = vmatprep.subr.mxu0 0.0
        %1138 = vmatpush1.msra.mxu0 0.0
        %1139 = vmatprep.subr.mxu0 0.0
        %1140 = vmatpush1.msra.mxu0 0.0
        %1141 = vmatprep.subr.mxu0 0.0
        %1142 = vmatpush1.msra.mxu0 0.0
        %1143 = vmatprep.mubr.f32.mxu0 0.0
        %1144 = vmatmul.mubr.f32.gmra.mrb[0].mxu0 %v1032
        %v1145 = vpop.f32.mrb[0].mxu0
        %v1146 = vadd.f32 %v1029, %v1145
        %v1147 = vpop.f32.mrb[0].mxu0
        %1148 = vmatprep.mubr.f32.mxu0 0.0
        %1149 = vmatmul.mubr.f32.gmra.mrb[0].mxu0 %v1035
        %v1150 = vpop.f32.mrb[0].mxu0
        %v1151 = vadd.f32 %v1029, %v1150
        %v1152 = vpop.f32.mrb[0].mxu0
        %1153 = vmatprep.mubr.f32.mxu0 0.0
        %1154 = vmatmul.mubr.f32.gmra.mrb[0].mxu0 %v1038
        %v1155 = vpop.f32.mrb[0].mxu0
        %v1156 = vadd.f32 %v1029, %v1155
        %v1157 = vpop.f32.mrb[0].mxu0
        %1158 = vmatprep.mubr.f32.mxu0 0.0
        %1159 = vmatmul.mubr.f32.gmra.mrb[0].mxu0 %v1041
        %v1160 = vpop.f32.mrb[0].mxu0
        %v1161 = vadd.f32 %v1029, %v1160
        %v1162 = vpop.f32.mrb[0].mxu0
        %1163 = vmatprep.mubr.f32.mxu0 0.0
        %1164 = vmatmul.mubr.f32.gmra.mrb[0].mxu0 %v1044
        %v1165 = vpop.f32.mrb[0].mxu0
        %v1166 = vadd.f32 %v1029, %v1165
        %v1167 = vpop.f32.mrb[0].mxu0
        %1168 = vmatprep.mubr.f32.mxu0 0.0
        %1169 = vmatmul.mubr.f32.gmra.mrb[0].mxu0 %v1047
        %v1170 = vpop.f32.mrb[0].mxu0
        %v1171 = vadd.f32 %v1029, %v1170
        %v1172 = vpop.f32.mrb[0].mxu0
        %1173 = vmatprep.mubr.f32.mxu0 0.0
        %1174 = vmatmul.mubr.f32.gmra.mrb[0].mxu0 %v1050
        %v1175 = vpop.f32.mrb[0].mxu0
        %v1176 = vadd.f32 %v1029, %v1175
        %v1177 = vpop.f32.mrb[0].mxu0
        %1178 = vmatprep.mubr.f32.mxu0 0.0
        %1179 = vmatmul.mubr.f32.gmra.mrb[0].mxu0 %v1053
        %v1180 = vpop.f32.mrb[0].mxu0
        %v1181 = vadd.f32 %v1029, %v1180
        %v1182 = vpop.f32.mrb[0].mxu0
        %1183 = vmatprep.mubr.f32.mxu0 0.0
        %1184 = vmatmul.mubr.f32.gmra.mrb[0].mxu0 %v1056
        %v1185 = vpop.f32.mrb[0].mxu0
        %v1186 = vadd.f32 %v1029, %v1185
        %v1187 = vpop.f32.mrb[0].mxu0
        %1188 = vmatprep.mubr.f32.mxu0 0.0
        %1189 = vmatmul.mubr.f32.gmra.mrb[0].mxu0 %v1059
        %v1190 = vpop.f32.mrb[0].mxu0
        %v1191 = vadd.f32 %v1029, %v1190
        %v1192 = vpop.f32.mrb[0].mxu0
        %1193 = vmatprep.mubr.f32.mxu0 0.0
        %1194 = vmatmul.mubr.f32.gmra.mrb[0].mxu0 %v1062
        %v1195 = vpop.f32.mrb[0].mxu0
        %v1196 = vadd.f32 %v1029, %v1195
        %v1197 = vpop.f32.mrb[0].mxu0
        %1198 = vmatprep.mubr.f32.mxu0 0.0
        %1199 = vmatmul.mubr.f32.gmra.mrb[0].mxu0 %v1065
        %v1200 = vpop.f32.mrb[0].mxu0
        %v1201 = vadd.f32 %v1029, %v1200
        %v1202 = vpop.f32.mrb[0].mxu0
        %1203 = vmatprep.mubr.f32.mxu0 0.0
        %1204 = vmatmul.mubr.f32.gmra.mrb[0].mxu0 %v1068
        %v1205 = vpop.f32.mrb[0].mxu0
        %v1206 = vadd.f32 %v1029, %v1205
        %v1207 = vpop.f32.mrb[0].mxu0
        %1208 = vmatprep.mubr.f32.mxu0 0.0
        %1209 = vmatmul.mubr.f32.gmra.mrb[0].mxu0 %v1071
        %v1210 = vpop.f32.mrb[0].mxu0
        %v1211 = vadd.f32 %v1029, %v1210
        %v1212 = vpop.f32.mrb[0].mxu0
        %1213 = vmatprep.mubr.f32.mxu0 0.0
        %1214 = vmatmul.mubr.f32.gmra.mrb[0].mxu0 %v1074
        %v1215 = vpop.f32.mrb[0].mxu0
        %v1216 = vadd.f32 %v1029, %v1215
        %v1217 = vpop.f32.mrb[0].mxu0
        %1218 = vmatprep.mubr.f32.mxu0 0.0
        %1219 = vmatmul.mubr.f32.gmra.mrb[0].mxu0 %v1077
        %v1220 = vpop.f32.mrb[0].mxu0
        %v1221 = vadd.f32 %v1029, %v1220
        %v1222 = vpop.f32.mrb[0].mxu0
        %1223 = vdwg.mxu0
        %v1224 = vmul.f32 %v1146, 1.442695
        %v1225 = vpow.pop %v1224
        %v1226 = vmul.f32 %v1151, 1.442695
        %v1227 = vpow.pop %v1226
        %v1228 = vmul.f32 %v1156, 1.442695
        %v1229 = vpow.pop %v1228
        %v1230 = vmul.f32 %v1161, 1.442695
        %v1231 = vpow.pop %v1230
        %v1232 = vmul.f32 %v1166, 1.442695
        %v1233 = vpow.pop %v1232
        %v1234 = vmul.f32 %v1171, 1.442695
        %v1235 = vpow.pop %v1234
        %v1236 = vmul.f32 %v1176, 1.442695
        %v1237 = vpow.pop %v1236
        %v1238 = vmul.f32 %v1181, 1.442695
        %v1239 = vpow.pop %v1238
        %v1240 = vmul.f32 %v1186, 1.442695
        %v1241 = vpow.pop %v1240
        %v1242 = vmul.f32 %v1191, 1.442695
        %v1243 = vpow.pop %v1242
        %v1244 = vmul.f32 %v1196, 1.442695
        %v1245 = vpow.pop %v1244
        %v1246 = vmul.f32 %v1201, 1.442695
        %v1247 = vpow.pop %v1246
        %v1248 = vmul.f32 %v1206, 1.442695
        %v1249 = vpow.pop %v1248
        %v1250 = vmul.f32 %v1211, 1.442695
        %v1251 = vpow.pop %v1250
        %v1252 = vmul.f32 %v1216, 1.442695
        %v1253 = vpow.pop %v1252
        %v1254 = vmul.f32 %v1221, 1.442695
        %v1255 = vpow.pop %v1254
        %v1256 = vadd.f32 %v1225, 4.539993e-05
        %v1257 = vadd.f32 %v1227, 4.539993e-05
        %v1258 = vadd.f32 %v1229, 4.539993e-05
        %v1259 = vadd.f32 %v1231, 4.539993e-05
        %v1260 = vadd.f32 %v1233, 4.539993e-05
        %v1261 = vadd.f32 %v1235, 4.539993e-05
        %v1262 = vadd.f32 %v1237, 4.539993e-05
        %v1263 = vadd.f32 %v1239, 4.539993e-05
        %v1264 = vadd.f32 %v1241, 4.539993e-05
        %v1265 = vadd.f32 %v1243, 4.539993e-05
        %v1266 = vadd.f32 %v1245, 4.539993e-05
        %v1267 = vadd.f32 %v1247, 4.539993e-05
        %v1268 = vadd.f32 %v1249, 4.539993e-05
        %v1269 = vadd.f32 %v1251, 4.539993e-05
        %v1270 = vadd.f32 %v1253, 4.539993e-05
        %v1271 = vadd.f32 %v1255, 4.539993e-05
        %v1272 = vlog2.pop %v1256
        %v1273 = vmul.f32 %v1272, 0.6931472
        %v1274 = vlog2.pop %v1257
        %v1275 = vmul.f32 %v1274, 0.6931472
        %v1276 = vlog2.pop %v1258
        %v1277 = vmul.f32 %v1276, 0.6931472
        %v1278 = vlog2.pop %v1259
        %v1279 = vmul.f32 %v1278, 0.6931472
        %v1280 = vlog2.pop %v1260
        %v1281 = vmul.f32 %v1280, 0.6931472
        %v1282 = vlog2.pop %v1261
        %v1283 = vmul.f32 %v1282, 0.6931472
        %v1284 = vlog2.pop %v1262
        %v1285 = vmul.f32 %v1284, 0.6931472
        %v1286 = vlog2.pop %v1263
        %v1287 = vmul.f32 %v1286, 0.6931472
        %v1288 = vlog2.pop %v1264
        %v1289 = vmul.f32 %v1288, 0.6931472
        %v1290 = vlog2.pop %v1265
        %v1291 = vmul.f32 %v1290, 0.6931472
        %v1292 = vlog2.pop %v1266
        %v1293 = vmul.f32 %v1292, 0.6931472
        %v1294 = vlog2.pop %v1267
        %v1295 = vmul.f32 %v1294, 0.6931472
        %v1296 = vlog2.pop %v1268
        %v1297 = vmul.f32 %v1296, 0.6931472
        %v1298 = vlog2.pop %v1269
        %v1299 = vmul.f32 %v1298, 0.6931472
        %v1300 = vlog2.pop %v1270
        %v1301 = vmul.f32 %v1300, 0.6931472
        %v1302 = vlog2.pop %v1271
        %v1303 = vmul.f32 %v1302, 0.6931472
        %v1304 = vsel %vm546, %v1273, %v1146
        %v1305 = vsel %vm546, %v1275, %v1151
        %v1306 = vsel %vm546, %v1277, %v1156
        %v1307 = vsel %vm546, %v1279, %v1161
        %v1308 = vsel %vm546, %v1281, %v1166
        %v1309 = vsel %vm546, %v1283, %v1171
        %v1310 = vsel %vm546, %v1285, %v1176
        %v1311 = vsel %vm546, %v1287, %v1181
        %v1312 = vsel %vm546, %v1289, %v1186
        %v1313 = vsel %vm546, %v1291, %v1191
        %v1314 = vsel %vm546, %v1293, %v1196
        %v1315 = vsel %vm546, %v1295, %v1201
        %v1316 = vsel %vm546, %v1297, %v1206
        %v1317 = vsel %vm546, %v1299, %v1211
        %v1318 = vsel %vm546, %v1301, %v1216
        %v1319 = vsel %vm546, %v1303, %v1221
        %v1320 = vrsqrt.pop %v1256
        %v1321 = vmul.f32 %v1256, %v1320
        %vm1322 = vcmp.eq.f32.partialorder %v1256, inf
        %v1323 = vsel %vm1322, %v1256, %v1321
        %vm1324 = vcmp.eq.f32.partialorder %v1256, 0.0
        %v1325 = vand.u32 %v1256, 2147483648
        %v1326 = vsel %vm1324, %v1325, %v1323
        %v1327 = vrsqrt.pop %v1257
        %v1328 = vmul.f32 %v1257, %v1327
        %vm1329 = vcmp.eq.f32.partialorder %v1257, inf
        %v1330 = vsel %vm1329, %v1257, %v1328
        %vm1331 = vcmp.eq.f32.partialorder %v1257, 0.0
        %v1332 = vand.u32 %v1257, 2147483648
        %v1333 = vsel %vm1331, %v1332, %v1330
        %v1334 = vrsqrt.pop %v1258
        %v1335 = vmul.f32 %v1258, %v1334
        %vm1336 = vcmp.eq.f32.partialorder %v1258, inf
        %v1337 = vsel %vm1336, %v1258, %v1335
        %vm1338 = vcmp.eq.f32.partialorder %v1258, 0.0
        %v1339 = vand.u32 %v1258, 2147483648
        %v1340 = vsel %vm1338, %v1339, %v1337
        %v1341 = vrsqrt.pop %v1259
        %v1342 = vmul.f32 %v1259, %v1341
        %vm1343 = vcmp.eq.f32.partialorder %v1259, inf
        %v1344 = vsel %vm1343, %v1259, %v1342
        %vm1345 = vcmp.eq.f32.partialorder %v1259, 0.0
        %v1346 = vand.u32 %v1259, 2147483648
        %v1347 = vsel %vm1345, %v1346, %v1344
        %v1348 = vrsqrt.pop %v1260
        %v1349 = vmul.f32 %v1260, %v1348
        %vm1350 = vcmp.eq.f32.partialorder %v1260, inf
        %v1351 = vsel %vm1350, %v1260, %v1349
        %vm1352 = vcmp.eq.f32.partialorder %v1260, 0.0
        %v1353 = vand.u32 %v1260, 2147483648
        %v1354 = vsel %vm1352, %v1353, %v1351
        %v1355 = vrsqrt.pop %v1261
        %v1356 = vmul.f32 %v1261, %v1355
        %vm1357 = vcmp.eq.f32.partialorder %v1261, inf
        %v1358 = vsel %vm1357, %v1261, %v1356
        %vm1359 = vcmp.eq.f32.partialorder %v1261, 0.0
        %v1360 = vand.u32 %v1261, 2147483648
        %v1361 = vsel %vm1359, %v1360, %v1358
        %v1362 = vrsqrt.pop %v1262
        %v1363 = vmul.f32 %v1262, %v1362
        %vm1364 = vcmp.eq.f32.partialorder %v1262, inf
        %v1365 = vsel %vm1364, %v1262, %v1363
        %vm1366 = vcmp.eq.f32.partialorder %v1262, 0.0
        %v1367 = vand.u32 %v1262, 2147483648
        %v1368 = vsel %vm1366, %v1367, %v1365
        %v1369 = vrsqrt.pop %v1263
        %v1370 = vmul.f32 %v1263, %v1369
        %vm1371 = vcmp.eq.f32.partialorder %v1263, inf
        %v1372 = vsel %vm1371, %v1263, %v1370
        %vm1373 = vcmp.eq.f32.partialorder %v1263, 0.0
        %v1374 = vand.u32 %v1263, 2147483648
        %v1375 = vsel %vm1373, %v1374, %v1372
        %v1376 = vrsqrt.pop %v1264
        %v1377 = vmul.f32 %v1264, %v1376
        %vm1378 = vcmp.eq.f32.partialorder %v1264, inf
        %v1379 = vsel %vm1378, %v1264, %v1377
        %vm1380 = vcmp.eq.f32.partialorder %v1264, 0.0
        %v1381 = vand.u32 %v1264, 2147483648
        %v1382 = vsel %vm1380, %v1381, %v1379
        %v1383 = vrsqrt.pop %v1265
        %v1384 = vmul.f32 %v1265, %v1383
        %vm1385 = vcmp.eq.f32.partialorder %v1265, inf
        %v1386 = vsel %vm1385, %v1265, %v1384
        %vm1387 = vcmp.eq.f32.partialorder %v1265, 0.0
        %v1388 = vand.u32 %v1265, 2147483648
        %v1389 = vsel %vm1387, %v1388, %v1386
        %v1390 = vrsqrt.pop %v1266
        %v1391 = vmul.f32 %v1266, %v1390
        %vm1392 = vcmp.eq.f32.partialorder %v1266, inf
        %v1393 = vsel %vm1392, %v1266, %v1391
        %vm1394 = vcmp.eq.f32.partialorder %v1266, 0.0
        %v1395 = vand.u32 %v1266, 2147483648
        %v1396 = vsel %vm1394, %v1395, %v1393
        %v1397 = vrsqrt.pop %v1267
        %v1398 = vmul.f32 %v1267, %v1397
        %vm1399 = vcmp.eq.f32.partialorder %v1267, inf
        %v1400 = vsel %vm1399, %v1267, %v1398
        %vm1401 = vcmp.eq.f32.partialorder %v1267, 0.0
        %v1402 = vand.u32 %v1267, 2147483648
        %v1403 = vsel %vm1401, %v1402, %v1400
        %v1404 = vrsqrt.pop %v1268
        %v1405 = vmul.f32 %v1268, %v1404
        %vm1406 = vcmp.eq.f32.partialorder %v1268, inf
        %v1407 = vsel %vm1406, %v1268, %v1405
        %vm1408 = vcmp.eq.f32.partialorder %v1268, 0.0
        %v1409 = vand.u32 %v1268, 2147483648
        %v1410 = vsel %vm1408, %v1409, %v1407
        %v1411 = vrsqrt.pop %v1269
        %v1412 = vmul.f32 %v1269, %v1411
        %vm1413 = vcmp.eq.f32.partialorder %v1269, inf
        %v1414 = vsel %vm1413, %v1269, %v1412
        %vm1415 = vcmp.eq.f32.partialorder %v1269, 0.0
        %v1416 = vand.u32 %v1269, 2147483648
        %v1417 = vsel %vm1415, %v1416, %v1414
        %v1418 = vrsqrt.pop %v1270
        %v1419 = vmul.f32 %v1270, %v1418
        %vm1420 = vcmp.eq.f32.partialorder %v1270, inf
        %v1421 = vsel %vm1420, %v1270, %v1419
        %vm1422 = vcmp.eq.f32.partialorder %v1270, 0.0
        %v1423 = vand.u32 %v1270, 2147483648
        %v1424 = vsel %vm1422, %v1423, %v1421
        %v1425 = vrsqrt.pop %v1271
        %v1426 = vmul.f32 %v1271, %v1425
        %vm1427 = vcmp.eq.f32.partialorder %v1271, inf
        %v1428 = vsel %vm1427, %v1271, %v1426
        %vm1429 = vcmp.eq.f32.partialorder %v1271, 0.0
        %v1430 = vand.u32 %v1271, 2147483648
        %v1431 = vsel %vm1429, %v1430, %v1428
        %v1432 = vmul.f32 %v526, %v1326
        %v1433 = vmul.f32 %v527, %v1333
        %v1434 = vmul.f32 %v528, %v1340
        %v1435 = vmul.f32 %v529, %v1347
        %v1436 = vmul.f32 %v530, %v1354
        %v1437 = vmul.f32 %v531, %v1361
        %v1438 = vmul.f32 %v532, %v1368
        %v1439 = vmul.f32 %v533, %v1375
        %v1440 = vmul.f32 %v534, %v1382
        %v1441 = vmul.f32 %v535, %v1389
        %v1442 = vmul.f32 %v536, %v1396
        %v1443 = vmul.f32 %v537, %v1403
        %v1444 = vmul.f32 %v538, %v1410
        %v1445 = vmul.f32 %v539, %v1417
        %v1446 = vmul.f32 %v540, %v1424
        %v1447 = vmul.f32 %v541, %v1431
        %v1448 = vsel %vm546, %v1432, %v1146
        %v1449 = vsel %vm546, %v1433, %v1151
        %v1450 = vsel %vm546, %v1434, %v1156
        %v1451 = vsel %vm546, %v1435, %v1161
        %v1452 = vsel %vm546, %v1436, %v1166
        %v1453 = vsel %vm546, %v1437, %v1171
        %v1454 = vsel %vm546, %v1438, %v1176
        %v1455 = vsel %vm546, %v1439, %v1181
        %v1456 = vsel %vm546, %v1440, %v1186
        %v1457 = vsel %vm546, %v1441, %v1191
        %v1458 = vsel %vm546, %v1442, %v1196
        %v1459 = vsel %vm546, %v1443, %v1201
        %v1460 = vsel %vm546, %v1444, %v1206
        %v1461 = vsel %vm546, %v1445, %v1211
        %v1462 = vsel %vm546, %v1446, %v1216
        %v1463 = vsel %vm546, %v1447, %v1221
        %v1464 = vld [vmem:[%s8] sm:$0xff]
        %v1465 = vld [vmem:[%s8 + $0x8] sm:$0xff]
        %v1466 = vld [vmem:[%s8 + $0x10] sm:$0xff]
        %v1467 = vld [vmem:[%s8 + $0x18] sm:$0xff]
        %v1468 = vld [vmem:[%s8 + $0x20] sm:$0xff]
        %v1469 = vld [vmem:[%s8 + $0x28] sm:$0xff]
        %v1470 = vld [vmem:[%s8 + $0x30] sm:$0xff]
        %v1471 = vld [vmem:[%s8 + $0x38] sm:$0xff]
        %v1472 = vld [vmem:[%s8 + $0x40] sm:$0xff]
        %v1473 = vld [vmem:[%s8 + $0x48] sm:$0xff]
        %v1474 = vld [vmem:[%s8 + $0x50] sm:$0xff]
        %v1475 = vld [vmem:[%s8 + $0x58] sm:$0xff]
        %v1476 = vld [vmem:[%s8 + $0x60] sm:$0xff]
        %v1477 = vld [vmem:[%s8 + $0x68] sm:$0xff]
        %v1478 = vld [vmem:[%s8 + $0x70] sm:$0xff]
        %v1479 = vld [vmem:[%s8 + $0x78] sm:$0xff]
        %v1480 = vld [vmem:[#allocation8] sm:$0x1]
        %v1482 = vlaneseq
        %v1483 = vshrl.u32 %v1482, 7
        %v1484 = vsub.s32 0, %v1483
        %v1485 = vrot.slane %v1480, %v1484
        %1487 = vmatprep.subr.mxu0 0.0
        %1488 = vmatpush1.msra.mxu0 %v1464
        %1489 = vmatprep.subr.mxu0 0.0
        %1490 = vmatpush1.msra.mxu0 %v1465
        %1491 = vmatprep.subr.mxu0 0.0
        %1492 = vmatpush1.msra.mxu0 %v1466
        %1493 = vmatprep.subr.mxu0 0.0
        %1494 = vmatpush1.msra.mxu0 %v1467
        %1495 = vmatprep.subr.mxu0 0.0
        %1496 = vmatpush1.msra.mxu0 %v1468
        %1497 = vmatprep.subr.mxu0 0.0
        %1498 = vmatpush1.msra.mxu0 %v1469
        %1499 = vmatprep.subr.mxu0 0.0
        %1500 = vmatpush1.msra.mxu0 %v1470
        %1501 = vmatprep.subr.mxu0 0.0
        %1502 = vmatpush1.msra.mxu0 %v1471
        %1503 = vmatprep.subr.mxu0 0.0
        %1504 = vmatpush1.msra.mxu0 %v1472
        %1505 = vmatprep.subr.mxu0 0.0
        %1506 = vmatpush1.msra.mxu0 %v1473
        %1507 = vmatprep.subr.mxu0 0.0
        %1508 = vmatpush1.msra.mxu0 %v1474
        %1509 = vmatprep.subr.mxu0 0.0
        %1510 = vmatpush1.msra.mxu0 %v1475
        %1511 = vmatprep.subr.mxu0 0.0
        %1512 = vmatpush1.msra.mxu0 %v1476
        %1513 = vmatprep.subr.mxu0 0.0
        %1514 = vmatpush1.msra.mxu0 %v1477
        %1515 = vmatprep.subr.mxu0 0.0
        %1516 = vmatpush1.msra.mxu0 %v1478
        %1517 = vmatprep.subr.mxu0 0.0
        %1518 = vmatpush1.msra.mxu0 %v1479
        %1519 = vmatprep.subr.mxu0 0.0
        %1520 = vmatpush1.msra.mxu0 0.0
        %1521 = vmatprep.subr.mxu0 0.0
        %1522 = vmatpush1.msra.mxu0 0.0
        %1523 = vmatprep.subr.mxu0 0.0
        %1524 = vmatpush1.msra.mxu0 0.0
        %1525 = vmatprep.subr.mxu0 0.0
        %1526 = vmatpush1.msra.mxu0 0.0
        %1527 = vmatprep.subr.mxu0 0.0
        %1528 = vmatpush1.msra.mxu0 0.0
        %1529 = vmatprep.subr.mxu0 0.0
        %1530 = vmatpush1.msra.mxu0 0.0
        %1531 = vmatprep.subr.mxu0 0.0
        %1532 = vmatpush1.msra.mxu0 0.0
        %1533 = vmatprep.subr.mxu0 0.0
        %1534 = vmatpush1.msra.mxu0 0.0
        %1535 = vmatprep.subr.mxu0 0.0
        %1536 = vmatpush1.msra.mxu0 0.0
        %1537 = vmatprep.subr.mxu0 0.0
        %1538 = vmatpush1.msra.mxu0 0.0
        %1539 = vmatprep.subr.mxu0 0.0
        %1540 = vmatpush1.msra.mxu0 0.0
        %1541 = vmatprep.subr.mxu0 0.0
        %1542 = vmatpush1.msra.mxu0 0.0
        %1543 = vmatprep.subr.mxu0 0.0
        %1544 = vmatpush1.msra.mxu0 0.0
        %1545 = vmatprep.subr.mxu0 0.0
        %1546 = vmatpush1.msra.mxu0 0.0
        %1547 = vmatprep.subr.mxu0 0.0
        %1548 = vmatpush1.msra.mxu0 0.0
        %1549 = vmatprep.subr.mxu0 0.0
        %1550 = vmatpush1.msra.mxu0 0.0
        %1551 = vmatprep.mubr.f32.mxu0 0.0
        %1552 = vmatmul.mubr.f32.gmra.mrb[0].mxu0 %v1448
        %v1553 = vpop.f32.mrb[0].mxu0
        %v1554 = vadd.f32 %v1485, %v1553
        %v1555 = vpop.f32.mrb[0].mxu0
        %1556 = vmatprep.mubr.f32.mxu0 0.0
        %1557 = vmatmul.mubr.f32.gmra.mrb[0].mxu0 %v1449
        %v1558 = vpop.f32.mrb[0].mxu0
        %v1559 = vadd.f32 %v1485, %v1558
        %v1560 = vpop.f32.mrb[0].mxu0
        %1561 = vmatprep.mubr.f32.mxu0 0.0
        %1562 = vmatmul.mubr.f32.gmra.mrb[0].mxu0 %v1450
        %v1563 = vpop.f32.mrb[0].mxu0
        %v1564 = vadd.f32 %v1485, %v1563
        %v1565 = vpop.f32.mrb[0].mxu0
        %1566 = vmatprep.mubr.f32.mxu0 0.0
        %1567 = vmatmul.mubr.f32.gmra.mrb[0].mxu0 %v1451
        %v1568 = vpop.f32.mrb[0].mxu0
        %v1569 = vadd.f32 %v1485, %v1568
        %v1570 = vpop.f32.mrb[0].mxu0
        %1571 = vmatprep.mubr.f32.mxu0 0.0
        %1572 = vmatmul.mubr.f32.gmra.mrb[0].mxu0 %v1452
        %v1573 = vpop.f32.mrb[0].mxu0
        %v1574 = vadd.f32 %v1485, %v1573
        %v1575 = vpop.f32.mrb[0].mxu0
        %1576 = vmatprep.mubr.f32.mxu0 0.0
        %1577 = vmatmul.mubr.f32.gmra.mrb[0].mxu0 %v1453
        %v1578 = vpop.f32.mrb[0].mxu0
        %v1579 = vadd.f32 %v1485, %v1578
        %v1580 = vpop.f32.mrb[0].mxu0
        %1581 = vmatprep.mubr.f32.mxu0 0.0
        %1582 = vmatmul.mubr.f32.gmra.mrb[0].mxu0 %v1454
        %v1583 = vpop.f32.mrb[0].mxu0
        %v1584 = vadd.f32 %v1485, %v1583
        %v1585 = vpop.f32.mrb[0].mxu0
        %1586 = vmatprep.mubr.f32.mxu0 0.0
        %1587 = vmatmul.mubr.f32.gmra.mrb[0].mxu0 %v1455
        %v1588 = vpop.f32.mrb[0].mxu0
        %v1589 = vadd.f32 %v1485, %v1588
        %v1590 = vpop.f32.mrb[0].mxu0
        %1591 = vmatprep.mubr.f32.mxu0 0.0
        %1592 = vmatmul.mubr.f32.gmra.mrb[0].mxu0 %v1456
        %v1593 = vpop.f32.mrb[0].mxu0
        %v1594 = vadd.f32 %v1485, %v1593
        %v1595 = vpop.f32.mrb[0].mxu0
        %1596 = vmatprep.mubr.f32.mxu0 0.0
        %1597 = vmatmul.mubr.f32.gmra.mrb[0].mxu0 %v1457
        %v1598 = vpop.f32.mrb[0].mxu0
        %v1599 = vadd.f32 %v1485, %v1598
        %v1600 = vpop.f32.mrb[0].mxu0
        %1601 = vmatprep.mubr.f32.mxu0 0.0
        %1602 = vmatmul.mubr.f32.gmra.mrb[0].mxu0 %v1458
        %v1603 = vpop.f32.mrb[0].mxu0
        %v1604 = vadd.f32 %v1485, %v1603
        %v1605 = vpop.f32.mrb[0].mxu0
        %1606 = vmatprep.mubr.f32.mxu0 0.0
        %1607 = vmatmul.mubr.f32.gmra.mrb[0].mxu0 %v1459
        %v1608 = vpop.f32.mrb[0].mxu0
        %v1609 = vadd.f32 %v1485, %v1608
        %v1610 = vpop.f32.mrb[0].mxu0
        %1611 = vmatprep.mubr.f32.mxu0 0.0
        %1612 = vmatmul.mubr.f32.gmra.mrb[0].mxu0 %v1460
        %v1613 = vpop.f32.mrb[0].mxu0
        %v1614 = vadd.f32 %v1485, %v1613
        %v1615 = vpop.f32.mrb[0].mxu0
        %1616 = vmatprep.mubr.f32.mxu0 0.0
        %1617 = vmatmul.mubr.f32.gmra.mrb[0].mxu0 %v1461
        %v1618 = vpop.f32.mrb[0].mxu0
        %v1619 = vadd.f32 %v1485, %v1618
        %v1620 = vpop.f32.mrb[0].mxu0
        %1621 = vmatprep.mubr.f32.mxu0 0.0
        %1622 = vmatmul.mubr.f32.gmra.mrb[0].mxu0 %v1462
        %v1623 = vpop.f32.mrb[0].mxu0
        %v1624 = vadd.f32 %v1485, %v1623
        %v1625 = vpop.f32.mrb[0].mxu0
        %1626 = vmatprep.mubr.f32.mxu0 0.0
        %1627 = vmatmul.mubr.f32.gmra.mrb[0].mxu0 %v1463
        %v1628 = vpop.f32.mrb[0].mxu0
        %v1629 = vadd.f32 %v1485, %v1628
        %v1630 = vpop.f32.mrb[0].mxu0
        %1631 = vdwg.mxu0
        %vm1632 = vcmp.gt.f32.partialorder %v1554, 0.0
        %vm1633 = vcmp.gt.f32.partialorder %v1559, 0.0
        %vm1634 = vcmp.gt.f32.partialorder %v1564, 0.0
        %vm1635 = vcmp.gt.f32.partialorder %v1569, 0.0
        %vm1636 = vcmp.gt.f32.partialorder %v1574, 0.0
        %vm1637 = vcmp.gt.f32.partialorder %v1579, 0.0
        %vm1638 = vcmp.gt.f32.partialorder %v1584, 0.0
        %vm1639 = vcmp.gt.f32.partialorder %v1589, 0.0
        %vm1640 = vcmp.gt.f32.partialorder %v1594, 0.0
        %vm1641 = vcmp.gt.f32.partialorder %v1599, 0.0
        %vm1642 = vcmp.gt.f32.partialorder %v1604, 0.0
        %vm1643 = vcmp.gt.f32.partialorder %v1609, 0.0
        %vm1644 = vcmp.gt.f32.partialorder %v1614, 0.0
        %vm1645 = vcmp.gt.f32.partialorder %v1619, 0.0
        %vm1646 = vcmp.gt.f32.partialorder %v1624, 0.0
        %vm1647 = vcmp.gt.f32.partialorder %v1629, 0.0
        %v1648 = vmul.f32 %v734, %v1554
        %v1649 = vmul.f32 %v734, %v1559
        %v1650 = vmul.f32 %v734, %v1564
        %v1651 = vmul.f32 %v734, %v1569
        %v1652 = vmul.f32 %v734, %v1574
        %v1653 = vmul.f32 %v734, %v1579
        %v1654 = vmul.f32 %v734, %v1584
        %v1655 = vmul.f32 %v734, %v1589
        %v1656 = vmul.f32 %v734, %v1594
        %v1657 = vmul.f32 %v734, %v1599
        %v1658 = vmul.f32 %v734, %v1604
        %v1659 = vmul.f32 %v734, %v1609
        %v1660 = vmul.f32 %v734, %v1614
        %v1661 = vmul.f32 %v734, %v1619
        %v1662 = vmul.f32 %v734, %v1624
        %v1663 = vmul.f32 %v734, %v1629
        %v1664 = vsel %vm1632, %v1554, %v1648
        %v1665 = vsel %vm1633, %v1559, %v1649
        %v1666 = vsel %vm1634, %v1564, %v1650
        %v1667 = vsel %vm1635, %v1569, %v1651
        %v1668 = vsel %vm1636, %v1574, %v1652
        %v1669 = vsel %vm1637, %v1579, %v1653
        %v1670 = vsel %vm1638, %v1584, %v1654
        %v1671 = vsel %vm1639, %v1589, %v1655
        %v1672 = vsel %vm1640, %v1594, %v1656
        %v1673 = vsel %vm1641, %v1599, %v1657
        %v1674 = vsel %vm1642, %v1604, %v1658
        %v1675 = vsel %vm1643, %v1609, %v1659
        %v1676 = vsel %vm1644, %v1614, %v1660
        %v1677 = vsel %vm1645, %v1619, %v1661
        %v1678 = vsel %vm1646, %v1624, %v1662
        %v1679 = vsel %vm1647, %v1629, %v1663
        %v1680 = vld [vmem:[%s10] sm:$0xff]
        %v1681 = vld [vmem:[%s10 + $0x8] sm:$0xff]
        %v1682 = vld [vmem:[%s10 + $0x10] sm:$0xff]
        %v1683 = vld [vmem:[%s10 + $0x18] sm:$0xff]
        %v1684 = vld [vmem:[%s11] sm:$0x1]
        %v1686 = vlaneseq
        %v1687 = vshrl.u32 %v1686, 7
        %v1688 = vsub.s32 0, %v1687
        %v1689 = vrot.slane %v1684, %v1688
        %v1692 = vsel %vm778, %v1664, 0
        %v1695 = vsel %vm778, %v1665, 0
        %v1698 = vsel %vm778, %v1666, 0
        %v1701 = vsel %vm778, %v1667, 0
        %v1704 = vsel %vm778, %v1668, 0
        %v1707 = vsel %vm778, %v1669, 0
        %v1710 = vsel %vm778, %v1670, 0
        %v1713 = vsel %vm778, %v1671, 0
        %v1716 = vsel %vm778, %v1672, 0
        %v1719 = vsel %vm778, %v1673, 0
        %v1722 = vsel %vm778, %v1674, 0
        %v1725 = vsel %vm778, %v1675, 0
        %v1728 = vsel %vm778, %v1676, 0
        %v1731 = vsel %vm778, %v1677, 0
        %v1734 = vsel %vm778, %v1678, 0
        %v1737 = vsel %vm778, %v1679, 0
        %1739 = vmatprep.subr.mxu0 0.0
        %1740 = vmatpush1.msra.mxu0 %v1680
        %1741 = vmatprep.subr.mxu0 0.0
        %1742 = vmatpush1.msra.mxu0 %v1681
        %1743 = vmatprep.subr.mxu0 0.0
        %1744 = vmatpush1.msra.mxu0 %v1682
        %1745 = vmatprep.subr.mxu0 0.0
        %1746 = vmatpush1.msra.mxu0 %v1683
        %1747 = vmatprep.subr.mxu0 0.0
        %1748 = vmatpush1.msra.mxu0 0.0
        %1749 = vmatprep.subr.mxu0 0.0
        %1750 = vmatpush1.msra.mxu0 0.0
        %1751 = vmatprep.subr.mxu0 0.0
        %1752 = vmatpush1.msra.mxu0 0.0
        %1753 = vmatprep.subr.mxu0 0.0
        %1754 = vmatpush1.msra.mxu0 0.0
        %1755 = vmatprep.subr.mxu0 0.0
        %1756 = vmatpush1.msra.mxu0 0.0
        %1757 = vmatprep.subr.mxu0 0.0
        %1758 = vmatpush1.msra.mxu0 0.0
        %1759 = vmatprep.subr.mxu0 0.0
        %1760 = vmatpush1.msra.mxu0 0.0
        %1761 = vmatprep.subr.mxu0 0.0
        %1762 = vmatpush1.msra.mxu0 0.0
        %1763 = vmatprep.subr.mxu0 0.0
        %1764 = vmatpush1.msra.mxu0 0.0
        %1765 = vmatprep.subr.mxu0 0.0
        %1766 = vmatpush1.msra.mxu0 0.0
        %1767 = vmatprep.subr.mxu0 0.0
        %1768 = vmatpush1.msra.mxu0 0.0
        %1769 = vmatprep.subr.mxu0 0.0
        %1770 = vmatpush1.msra.mxu0 0.0
        %1771 = vmatprep.subr.mxu0 0.0
        %1772 = vmatpush1.msra.mxu0 0.0
        %1773 = vmatprep.subr.mxu0 0.0
        %1774 = vmatpush1.msra.mxu0 0.0
        %1775 = vmatprep.subr.mxu0 0.0
        %1776 = vmatpush1.msra.mxu0 0.0
        %1777 = vmatprep.subr.mxu0 0.0
        %1778 = vmatpush1.msra.mxu0 0.0
        %1779 = vmatprep.subr.mxu0 0.0
        %1780 = vmatpush1.msra.mxu0 0.0
        %1781 = vmatprep.subr.mxu0 0.0
        %1782 = vmatpush1.msra.mxu0 0.0
        %1783 = vmatprep.subr.mxu0 0.0
        %1784 = vmatpush1.msra.mxu0 0.0
        %1785 = vmatprep.subr.mxu0 0.0
        %1786 = vmatpush1.msra.mxu0 0.0
        %1787 = vmatprep.subr.mxu0 0.0
        %1788 = vmatpush1.msra.mxu0 0.0
        %1789 = vmatprep.subr.mxu0 0.0
        %1790 = vmatpush1.msra.mxu0 0.0
        %1791 = vmatprep.subr.mxu0 0.0
        %1792 = vmatpush1.msra.mxu0 0.0
        %1793 = vmatprep.subr.mxu0 0.0
        %1794 = vmatpush1.msra.mxu0 0.0
        %1795 = vmatprep.subr.mxu0 0.0
        %1796 = vmatpush1.msra.mxu0 0.0
        %1797 = vmatprep.subr.mxu0 0.0
        %1798 = vmatpush1.msra.mxu0 0.0
        %1799 = vmatprep.subr.mxu0 0.0
        %1800 = vmatpush1.msra.mxu0 0.0
        %1801 = vmatprep.subr.mxu0 0.0
        %1802 = vmatpush1.msra.mxu0 0.0
        %1803 = vmatprep.mubr.f32.mxu0 0.0
        %1804 = vmatmul.mubr.f32.gmra.mrb[0].mxu0 %v1692
        %v1805 = vpop.f32.mrb[0].mxu0
        %v1806 = vadd.f32 %v1689, %v1805
        %v1807 = vpop.f32.mrb[0].mxu0
        %1808 = vmatprep.mubr.f32.mxu0 0.0
        %1809 = vmatmul.mubr.f32.gmra.mrb[0].mxu0 %v1695
        %v1810 = vpop.f32.mrb[0].mxu0
        %v1811 = vadd.f32 %v1689, %v1810
        %v1812 = vpop.f32.mrb[0].mxu0
        %1813 = vmatprep.mubr.f32.mxu0 0.0
        %1814 = vmatmul.mubr.f32.gmra.mrb[0].mxu0 %v1698
        %v1815 = vpop.f32.mrb[0].mxu0
        %v1816 = vadd.f32 %v1689, %v1815
        %v1817 = vpop.f32.mrb[0].mxu0
        %1818 = vmatprep.mubr.f32.mxu0 0.0
        %1819 = vmatmul.mubr.f32.gmra.mrb[0].mxu0 %v1701
        %v1820 = vpop.f32.mrb[0].mxu0
        %v1821 = vadd.f32 %v1689, %v1820
        %v1822 = vpop.f32.mrb[0].mxu0
        %1823 = vmatprep.mubr.f32.mxu0 0.0
        %1824 = vmatmul.mubr.f32.gmra.mrb[0].mxu0 %v1704
        %v1825 = vpop.f32.mrb[0].mxu0
        %v1826 = vadd.f32 %v1689, %v1825
        %v1827 = vpop.f32.mrb[0].mxu0
        %1828 = vmatprep.mubr.f32.mxu0 0.0
        %1829 = vmatmul.mubr.f32.gmra.mrb[0].mxu0 %v1707
        %v1830 = vpop.f32.mrb[0].mxu0
        %v1831 = vadd.f32 %v1689, %v1830
        %v1832 = vpop.f32.mrb[0].mxu0
        %1833 = vmatprep.mubr.f32.mxu0 0.0
        %1834 = vmatmul.mubr.f32.gmra.mrb[0].mxu0 %v1710
        %v1835 = vpop.f32.mrb[0].mxu0
        %v1836 = vadd.f32 %v1689, %v1835
        %v1837 = vpop.f32.mrb[0].mxu0
        %1838 = vmatprep.mubr.f32.mxu0 0.0
        %1839 = vmatmul.mubr.f32.gmra.mrb[0].mxu0 %v1713
        %v1840 = vpop.f32.mrb[0].mxu0
        %v1841 = vadd.f32 %v1689, %v1840
        %v1842 = vpop.f32.mrb[0].mxu0
        %1843 = vmatprep.mubr.f32.mxu0 0.0
        %1844 = vmatmul.mubr.f32.gmra.mrb[0].mxu0 %v1716
        %v1845 = vpop.f32.mrb[0].mxu0
        %v1846 = vadd.f32 %v1689, %v1845
        %v1847 = vpop.f32.mrb[0].mxu0
        %1848 = vmatprep.mubr.f32.mxu0 0.0
        %1849 = vmatmul.mubr.f32.gmra.mrb[0].mxu0 %v1719
        %v1850 = vpop.f32.mrb[0].mxu0
        %v1851 = vadd.f32 %v1689, %v1850
        %v1852 = vpop.f32.mrb[0].mxu0
        %1853 = vmatprep.mubr.f32.mxu0 0.0
        %1854 = vmatmul.mubr.f32.gmra.mrb[0].mxu0 %v1722
        %v1855 = vpop.f32.mrb[0].mxu0
        %v1856 = vadd.f32 %v1689, %v1855
        %v1857 = vpop.f32.mrb[0].mxu0
        %1858 = vmatprep.mubr.f32.mxu0 0.0
        %1859 = vmatmul.mubr.f32.gmra.mrb[0].mxu0 %v1725
        %v1860 = vpop.f32.mrb[0].mxu0
        %v1861 = vadd.f32 %v1689, %v1860
        %v1862 = vpop.f32.mrb[0].mxu0
        %1863 = vmatprep.mubr.f32.mxu0 0.0
        %1864 = vmatmul.mubr.f32.gmra.mrb[0].mxu0 %v1728
        %v1865 = vpop.f32.mrb[0].mxu0
        %v1866 = vadd.f32 %v1689, %v1865
        %v1867 = vpop.f32.mrb[0].mxu0
        %1868 = vmatprep.mubr.f32.mxu0 0.0
        %1869 = vmatmul.mubr.f32.gmra.mrb[0].mxu0 %v1731
        %v1870 = vpop.f32.mrb[0].mxu0
        %v1871 = vadd.f32 %v1689, %v1870
        %v1872 = vpop.f32.mrb[0].mxu0
        %1873 = vmatprep.mubr.f32.mxu0 0.0
        %1874 = vmatmul.mubr.f32.gmra.mrb[0].mxu0 %v1734
        %v1875 = vpop.f32.mrb[0].mxu0
        %v1876 = vadd.f32 %v1689, %v1875
        %v1877 = vpop.f32.mrb[0].mxu0
        %1878 = vmatprep.mubr.f32.mxu0 0.0
        %1879 = vmatmul.mubr.f32.gmra.mrb[0].mxu0 %v1737
        %v1880 = vpop.f32.mrb[0].mxu0
        %v1881 = vadd.f32 %v1689, %v1880
        %v1882 = vpop.f32.mrb[0].mxu0
        %1883 = vdwg.mxu0
        %vm1884 = vcmp.gt.f32.partialorder %v1806, 0.0
        %vm1885 = vcmp.gt.f32.partialorder %v1811, 0.0
        %vm1886 = vcmp.gt.f32.partialorder %v1816, 0.0
        %vm1887 = vcmp.gt.f32.partialorder %v1821, 0.0
        %vm1888 = vcmp.gt.f32.partialorder %v1826, 0.0
        %vm1889 = vcmp.gt.f32.partialorder %v1831, 0.0
        %vm1890 = vcmp.gt.f32.partialorder %v1836, 0.0
        %vm1891 = vcmp.gt.f32.partialorder %v1841, 0.0
        %vm1892 = vcmp.gt.f32.partialorder %v1846, 0.0
        %vm1893 = vcmp.gt.f32.partialorder %v1851, 0.0
        %vm1894 = vcmp.gt.f32.partialorder %v1856, 0.0
        %vm1895 = vcmp.gt.f32.partialorder %v1861, 0.0
        %vm1896 = vcmp.gt.f32.partialorder %v1866, 0.0
        %vm1897 = vcmp.gt.f32.partialorder %v1871, 0.0
        %vm1898 = vcmp.gt.f32.partialorder %v1876, 0.0
        %vm1899 = vcmp.gt.f32.partialorder %v1881, 0.0
        %v1900 = vmul.f32 %v734, %v1806
        %v1901 = vmul.f32 %v734, %v1811
        %v1902 = vmul.f32 %v734, %v1816
        %v1903 = vmul.f32 %v734, %v1821
        %v1904 = vmul.f32 %v734, %v1826
        %v1905 = vmul.f32 %v734, %v1831
        %v1906 = vmul.f32 %v734, %v1836
        %v1907 = vmul.f32 %v734, %v1841
        %v1908 = vmul.f32 %v734, %v1846
        %v1909 = vmul.f32 %v734, %v1851
        %v1910 = vmul.f32 %v734, %v1856
        %v1911 = vmul.f32 %v734, %v1861
        %v1912 = vmul.f32 %v734, %v1866
        %v1913 = vmul.f32 %v734, %v1871
        %v1914 = vmul.f32 %v734, %v1876
        %v1915 = vmul.f32 %v734, %v1881
        %v1916 = vsel %vm1884, %v1806, %v1900
        %v1917 = vsel %vm1885, %v1811, %v1901
        %v1918 = vsel %vm1886, %v1816, %v1902
        %v1919 = vsel %vm1887, %v1821, %v1903
        %v1920 = vsel %vm1888, %v1826, %v1904
        %v1921 = vsel %vm1889, %v1831, %v1905
        %v1922 = vsel %vm1890, %v1836, %v1906
        %v1923 = vsel %vm1891, %v1841, %v1907
        %v1924 = vsel %vm1892, %v1846, %v1908
        %v1925 = vsel %vm1893, %v1851, %v1909
        %v1926 = vsel %vm1894, %v1856, %v1910
        %v1927 = vsel %vm1895, %v1861, %v1911
        %v1928 = vsel %vm1896, %v1866, %v1912
        %v1929 = vsel %vm1897, %v1871, %v1913
        %v1930 = vsel %vm1898, %v1876, %v1914
        %v1931 = vsel %vm1899, %v1881, %v1915
        %v1932 = vld [vmem:[#allocation9] sm:$0xff]
        %v1933 = vld [vmem:[#allocation9 + $0x8] sm:$0xff]
        %v1934 = vld [vmem:[#allocation9 + $0x10] sm:$0xff]
        %v1935 = vld [vmem:[#allocation9 + $0x18] sm:$0xff]
        %v1936 = vld [vmem:[%s13] sm:$0x1]
        %v1938 = vlaneseq
        %v1939 = vshrl.u32 %v1938, 7
        %v1940 = vsub.s32 0, %v1939
        %v1941 = vrot.slane %v1936, %v1940
        %v1944 = vsel %vm778, %v1916, 0
        %v1947 = vsel %vm778, %v1917, 0
        %v1950 = vsel %vm778, %v1918, 0
        %v1953 = vsel %vm778, %v1919, 0
        %v1956 = vsel %vm778, %v1920, 0
        %v1959 = vsel %vm778, %v1921, 0
        %v1962 = vsel %vm778, %v1922, 0
        %v1965 = vsel %vm778, %v1923, 0
        %v1968 = vsel %vm778, %v1924, 0
        %v1971 = vsel %vm778, %v1925, 0
        %v1974 = vsel %vm778, %v1926, 0
        %v1977 = vsel %vm778, %v1927, 0
        %v1980 = vsel %vm778, %v1928, 0
        %v1983 = vsel %vm778, %v1929, 0
        %v1986 = vsel %vm778, %v1930, 0
        %v1989 = vsel %vm778, %v1931, 0
        %1991 = vmatprep.subr.mxu0 0.0
        %1992 = vmatpush1.msra.mxu0 %v1932
        %1993 = vmatprep.subr.mxu0 0.0
        %1994 = vmatpush1.msra.mxu0 %v1933
        %1995 = vmatprep.subr.mxu0 0.0
        %1996 = vmatpush1.msra.mxu0 %v1934
        %1997 = vmatprep.subr.mxu0 0.0
        %1998 = vmatpush1.msra.mxu0 %v1935
        %1999 = vmatprep.subr.mxu0 0.0
        %2000 = vmatpush1.msra.mxu0 0.0
        %2001 = vmatprep.subr.mxu0 0.0
        %2002 = vmatpush1.msra.mxu0 0.0
        %2003 = vmatprep.subr.mxu0 0.0
        %2004 = vmatpush1.msra.mxu0 0.0
        %2005 = vmatprep.subr.mxu0 0.0
        %2006 = vmatpush1.msra.mxu0 0.0
        %2007 = vmatprep.subr.mxu0 0.0
        %2008 = vmatpush1.msra.mxu0 0.0
        %2009 = vmatprep.subr.mxu0 0.0
        %2010 = vmatpush1.msra.mxu0 0.0
        %2011 = vmatprep.subr.mxu0 0.0
        %2012 = vmatpush1.msra.mxu0 0.0
        %2013 = vmatprep.subr.mxu0 0.0
        %2014 = vmatpush1.msra.mxu0 0.0
        %2015 = vmatprep.subr.mxu0 0.0
        %2016 = vmatpush1.msra.mxu0 0.0
        %2017 = vmatprep.subr.mxu0 0.0
        %2018 = vmatpush1.msra.mxu0 0.0
        %2019 = vmatprep.subr.mxu0 0.0
        %2020 = vmatpush1.msra.mxu0 0.0
        %2021 = vmatprep.subr.mxu0 0.0
        %2022 = vmatpush1.msra.mxu0 0.0
        %2023 = vmatprep.subr.mxu0 0.0
        %2024 = vmatpush1.msra.mxu0 0.0
        %2025 = vmatprep.subr.mxu0 0.0
        %2026 = vmatpush1.msra.mxu0 0.0
        %2027 = vmatprep.subr.mxu0 0.0
        %2028 = vmatpush1.msra.mxu0 0.0
        %2029 = vmatprep.subr.mxu0 0.0
        %2030 = vmatpush1.msra.mxu0 0.0
        %2031 = vmatprep.subr.mxu0 0.0
        %2032 = vmatpush1.msra.mxu0 0.0
        %2033 = vmatprep.subr.mxu0 0.0
        %2034 = vmatpush1.msra.mxu0 0.0
        %2035 = vmatprep.subr.mxu0 0.0
        %2036 = vmatpush1.msra.mxu0 0.0
        %2037 = vmatprep.subr.mxu0 0.0
        %2038 = vmatpush1.msra.mxu0 0.0
        %2039 = vmatprep.subr.mxu0 0.0
        %2040 = vmatpush1.msra.mxu0 0.0
        %2041 = vmatprep.subr.mxu0 0.0
        %2042 = vmatpush1.msra.mxu0 0.0
        %2043 = vmatprep.subr.mxu0 0.0
        %2044 = vmatpush1.msra.mxu0 0.0
        %2045 = vmatprep.subr.mxu0 0.0
        %2046 = vmatpush1.msra.mxu0 0.0
        %2047 = vmatprep.subr.mxu0 0.0
        %2048 = vmatpush1.msra.mxu0 0.0
        %2049 = vmatprep.subr.mxu0 0.0
        %2050 = vmatpush1.msra.mxu0 0.0
        %2051 = vmatprep.subr.mxu0 0.0
        %2052 = vmatpush1.msra.mxu0 0.0
        %2053 = vmatprep.subr.mxu0 0.0
        %2054 = vmatpush1.msra.mxu0 0.0
        %2055 = vmatprep.mubr.f32.mxu0 0.0
        %2056 = vmatmul.mubr.f32.gmra.mrb[0].mxu0 %v1944
        %v2057 = vpop.f32.mrb[0].mxu0
        %v2058 = vadd.f32 %v1941, %v2057
        %v2059 = vpop.f32.mrb[0].mxu0
        %2060 = vmatprep.mubr.f32.mxu0 0.0
        %2061 = vmatmul.mubr.f32.gmra.mrb[0].mxu0 %v1947
        %v2062 = vpop.f32.mrb[0].mxu0
        %v2063 = vadd.f32 %v1941, %v2062
        %v2064 = vpop.f32.mrb[0].mxu0
        %2065 = vmatprep.mubr.f32.mxu0 0.0
        %2066 = vmatmul.mubr.f32.gmra.mrb[0].mxu0 %v1950
        %v2067 = vpop.f32.mrb[0].mxu0
        %v2068 = vadd.f32 %v1941, %v2067
        %v2069 = vpop.f32.mrb[0].mxu0
        %2070 = vmatprep.mubr.f32.mxu0 0.0
        %2071 = vmatmul.mubr.f32.gmra.mrb[0].mxu0 %v1953
        %v2072 = vpop.f32.mrb[0].mxu0
        %v2073 = vadd.f32 %v1941, %v2072
        %v2074 = vpop.f32.mrb[0].mxu0
        %2075 = vmatprep.mubr.f32.mxu0 0.0
        %2076 = vmatmul.mubr.f32.gmra.mrb[0].mxu0 %v1956
        %v2077 = vpop.f32.mrb[0].mxu0
        %v2078 = vadd.f32 %v1941, %v2077
        %v2079 = vpop.f32.mrb[0].mxu0
        %2080 = vmatprep.mubr.f32.mxu0 0.0
        %2081 = vmatmul.mubr.f32.gmra.mrb[0].mxu0 %v1959
        %v2082 = vpop.f32.mrb[0].mxu0
        %v2083 = vadd.f32 %v1941, %v2082
        %v2084 = vpop.f32.mrb[0].mxu0
        %2085 = vmatprep.mubr.f32.mxu0 0.0
        %2086 = vmatmul.mubr.f32.gmra.mrb[0].mxu0 %v1962
        %v2087 = vpop.f32.mrb[0].mxu0
        %v2088 = vadd.f32 %v1941, %v2087
        %v2089 = vpop.f32.mrb[0].mxu0
        %2090 = vmatprep.mubr.f32.mxu0 0.0
        %2091 = vmatmul.mubr.f32.gmra.mrb[0].mxu0 %v1965
        %v2092 = vpop.f32.mrb[0].mxu0
        %v2093 = vadd.f32 %v1941, %v2092
        %v2094 = vpop.f32.mrb[0].mxu0
        %2095 = vmatprep.mubr.f32.mxu0 0.0
        %2096 = vmatmul.mubr.f32.gmra.mrb[0].mxu0 %v1968
        %v2097 = vpop.f32.mrb[0].mxu0
        %v2098 = vadd.f32 %v1941, %v2097
        %v2099 = vpop.f32.mrb[0].mxu0
        %2100 = vmatprep.mubr.f32.mxu0 0.0
        %2101 = vmatmul.mubr.f32.gmra.mrb[0].mxu0 %v1971
        %v2102 = vpop.f32.mrb[0].mxu0
        %v2103 = vadd.f32 %v1941, %v2102
        %v2104 = vpop.f32.mrb[0].mxu0
        %2105 = vmatprep.mubr.f32.mxu0 0.0
        %2106 = vmatmul.mubr.f32.gmra.mrb[0].mxu0 %v1974
        %v2107 = vpop.f32.mrb[0].mxu0
        %v2108 = vadd.f32 %v1941, %v2107
        %v2109 = vpop.f32.mrb[0].mxu0
        %2110 = vmatprep.mubr.f32.mxu0 0.0
        %2111 = vmatmul.mubr.f32.gmra.mrb[0].mxu0 %v1977
        %v2112 = vpop.f32.mrb[0].mxu0
        %v2113 = vadd.f32 %v1941, %v2112
        %v2114 = vpop.f32.mrb[0].mxu0
        %2115 = vmatprep.mubr.f32.mxu0 0.0
        %2116 = vmatmul.mubr.f32.gmra.mrb[0].mxu0 %v1980
        %v2117 = vpop.f32.mrb[0].mxu0
        %v2118 = vadd.f32 %v1941, %v2117
        %v2119 = vpop.f32.mrb[0].mxu0
        %2120 = vmatprep.mubr.f32.mxu0 0.0
        %2121 = vmatmul.mubr.f32.gmra.mrb[0].mxu0 %v1983
        %v2122 = vpop.f32.mrb[0].mxu0
        %v2123 = vadd.f32 %v1941, %v2122
        %v2124 = vpop.f32.mrb[0].mxu0
        %2125 = vmatprep.mubr.f32.mxu0 0.0
        %2126 = vmatmul.mubr.f32.gmra.mrb[0].mxu0 %v1986
        %v2127 = vpop.f32.mrb[0].mxu0
        %v2128 = vadd.f32 %v1941, %v2127
        %v2129 = vpop.f32.mrb[0].mxu0
        %2130 = vmatprep.mubr.f32.mxu0 0.0
        %2131 = vmatmul.mubr.f32.gmra.mrb[0].mxu0 %v1989
        %v2132 = vpop.f32.mrb[0].mxu0
        %v2133 = vadd.f32 %v1941, %v2132
        %v2134 = vpop.f32.mrb[0].mxu0
        %2135 = vdwg.mxu0
        %v2136 = vmul.f32 %v2058, 1.442695
        %v2137 = vpow.pop %v2136
        %v2138 = vmul.f32 %v2063, 1.442695
        %v2139 = vpow.pop %v2138
        %v2140 = vmul.f32 %v2068, 1.442695
        %v2141 = vpow.pop %v2140
        %v2142 = vmul.f32 %v2073, 1.442695
        %v2143 = vpow.pop %v2142
        %v2144 = vmul.f32 %v2078, 1.442695
        %v2145 = vpow.pop %v2144
        %v2146 = vmul.f32 %v2083, 1.442695
        %v2147 = vpow.pop %v2146
        %v2148 = vmul.f32 %v2088, 1.442695
        %v2149 = vpow.pop %v2148
        %v2150 = vmul.f32 %v2093, 1.442695
        %v2151 = vpow.pop %v2150
        %v2152 = vmul.f32 %v2098, 1.442695
        %v2153 = vpow.pop %v2152
        %v2154 = vmul.f32 %v2103, 1.442695
        %v2155 = vpow.pop %v2154
        %v2156 = vmul.f32 %v2108, 1.442695
        %v2157 = vpow.pop %v2156
        %v2158 = vmul.f32 %v2113, 1.442695
        %v2159 = vpow.pop %v2158
        %v2160 = vmul.f32 %v2118, 1.442695
        %v2161 = vpow.pop %v2160
        %v2162 = vmul.f32 %v2123, 1.442695
        %v2163 = vpow.pop %v2162
        %v2164 = vmul.f32 %v2128, 1.442695
        %v2165 = vpow.pop %v2164
        %v2166 = vmul.f32 %v2133, 1.442695
        %v2167 = vpow.pop %v2166
        %v2168 = vadd.f32 %v2137, 4.539993e-05
        %v2169 = vadd.f32 %v2139, 4.539993e-05
        %v2170 = vadd.f32 %v2141, 4.539993e-05
        %v2171 = vadd.f32 %v2143, 4.539993e-05
        %v2172 = vadd.f32 %v2145, 4.539993e-05
        %v2173 = vadd.f32 %v2147, 4.539993e-05
        %v2174 = vadd.f32 %v2149, 4.539993e-05
        %v2175 = vadd.f32 %v2151, 4.539993e-05
        %v2176 = vadd.f32 %v2153, 4.539993e-05
        %v2177 = vadd.f32 %v2155, 4.539993e-05
        %v2178 = vadd.f32 %v2157, 4.539993e-05
        %v2179 = vadd.f32 %v2159, 4.539993e-05
        %v2180 = vadd.f32 %v2161, 4.539993e-05
        %v2181 = vadd.f32 %v2163, 4.539993e-05
        %v2182 = vadd.f32 %v2165, 4.539993e-05
        %v2183 = vadd.f32 %v2167, 4.539993e-05
        %v2184 = vlog2.pop %v2168
        %v2185 = vmul.f32 %v2184, 0.6931472
        %v2186 = vlog2.pop %v2169
        %v2187 = vmul.f32 %v2186, 0.6931472
        %v2188 = vlog2.pop %v2170
        %v2189 = vmul.f32 %v2188, 0.6931472
        %v2190 = vlog2.pop %v2171
        %v2191 = vmul.f32 %v2190, 0.6931472
        %v2192 = vlog2.pop %v2172
        %v2193 = vmul.f32 %v2192, 0.6931472
        %v2194 = vlog2.pop %v2173
        %v2195 = vmul.f32 %v2194, 0.6931472
        %v2196 = vlog2.pop %v2174
        %v2197 = vmul.f32 %v2196, 0.6931472
        %v2198 = vlog2.pop %v2175
        %v2199 = vmul.f32 %v2198, 0.6931472
        %v2200 = vlog2.pop %v2176
        %v2201 = vmul.f32 %v2200, 0.6931472
        %v2202 = vlog2.pop %v2177
        %v2203 = vmul.f32 %v2202, 0.6931472
        %v2204 = vlog2.pop %v2178
        %v2205 = vmul.f32 %v2204, 0.6931472
        %v2206 = vlog2.pop %v2179
        %v2207 = vmul.f32 %v2206, 0.6931472
        %v2208 = vlog2.pop %v2180
        %v2209 = vmul.f32 %v2208, 0.6931472
        %v2210 = vlog2.pop %v2181
        %v2211 = vmul.f32 %v2210, 0.6931472
        %v2212 = vlog2.pop %v2182
        %v2213 = vmul.f32 %v2212, 0.6931472
        %v2214 = vlog2.pop %v2183
        %v2215 = vmul.f32 %v2214, 0.6931472
        %v2216 = vsel %vm549, %v2185, %v2058
        %v2217 = vsel %vm549, %v2187, %v2063
        %v2218 = vsel %vm549, %v2189, %v2068
        %v2219 = vsel %vm549, %v2191, %v2073
        %v2220 = vsel %vm549, %v2193, %v2078
        %v2221 = vsel %vm549, %v2195, %v2083
        %v2222 = vsel %vm549, %v2197, %v2088
        %v2223 = vsel %vm549, %v2199, %v2093
        %v2224 = vsel %vm549, %v2201, %v2098
        %v2225 = vsel %vm549, %v2203, %v2103
        %v2226 = vsel %vm549, %v2205, %v2108
        %v2227 = vsel %vm549, %v2207, %v2113
        %v2228 = vsel %vm549, %v2209, %v2118
        %v2229 = vsel %vm549, %v2211, %v2123
        %v2230 = vsel %vm549, %v2213, %v2128
        %v2231 = vsel %vm549, %v2215, %v2133
        %v2232 = vadd.f32 %v1304, %v2216
        %v2233 = vadd.f32 %v1305, %v2217
        %v2234 = vadd.f32 %v1306, %v2218
        %v2235 = vadd.f32 %v1307, %v2219
        %v2236 = vadd.f32 %v1308, %v2220
        %v2237 = vadd.f32 %v1309, %v2221
        %v2238 = vadd.f32 %v1310, %v2222
        %v2239 = vadd.f32 %v1311, %v2223
        %v2240 = vadd.f32 %v1312, %v2224
        %v2241 = vadd.f32 %v1313, %v2225
        %v2242 = vadd.f32 %v1314, %v2226
        %v2243 = vadd.f32 %v1315, %v2227
        %v2244 = vadd.f32 %v1316, %v2228
        %v2245 = vadd.f32 %v1317, %v2229
        %v2246 = vadd.f32 %v1318, %v2230
        %v2247 = vadd.f32 %v1319, %v2231
        %2248 = vst [vmem:[%s517] sm:$0xff] %v2232
        %2249 = vst [vmem:[%s517 + $0x8] sm:$0xff] %v2233
        %2250 = vst [vmem:[%s517 + $0x10] sm:$0xff] %v2234
        %2251 = vst [vmem:[%s517 + $0x18] sm:$0xff] %v2235
        %2252 = vst [vmem:[%s517 + $0x20] sm:$0xff] %v2236
        %2253 = vst [vmem:[%s517 + $0x28] sm:$0xff] %v2237
        %2254 = vst [vmem:[%s517 + $0x30] sm:$0xff] %v2238
        %2255 = vst [vmem:[%s517 + $0x38] sm:$0xff] %v2239
        %2256 = vst [vmem:[%s517 + $0x40] sm:$0xff] %v2240
        %2257 = vst [vmem:[%s517 + $0x48] sm:$0xff] %v2241
        %2258 = vst [vmem:[%s517 + $0x50] sm:$0xff] %v2242
        %2259 = vst [vmem:[%s517 + $0x58] sm:$0xff] %v2243
        %2260 = vst [vmem:[%s517 + $0x60] sm:$0xff] %v2244
        %2261 = vst [vmem:[%s517 + $0x68] sm:$0xff] %v2245
        %2262 = vst [vmem:[%s517 + $0x70] sm:$0xff] %v2246
        %2263 = vst [vmem:[%s517 + $0x78] sm:$0xff] %v2247
        %s2264 = sand.u32 %s339, 1
        %s2265 = scalar_lea.sflag [#allocation5], %s2264
        %s2266 = sand.u32 %s339, 1
        %s2267 = smul.addr %s2266, 128
        %s2268 = scalar_lea.vmem [#allocation11], %s2267
        // Predicated region
        $region93: #{tpu_custom_call.1} parent=75 // pred_check
          %p2269 = pneg %p349
        $region94: #{tpu_custom_call.1} parent=75 // pred_check_branch
          %2271 = sbr.rel (%p2269) target = $region96
        $region95: #{tpu_custom_call.1} parent=75 // pred_region
          %s2272 = smul.u32 16, %s32
          %s2274 = ssub.s32 2048, 2048
          %2275 = vsyncadd %s2265, %s2274
          %s2276 = smul.addr %s2272, 128
          %s2277 = scalar_lea.hbm %s14, %s2276
          %s2278 = sshll.u32 %s2268, 4
          %s2279 = int_to_ptr.vmem [resolvable:$true] %s2278
          %2284 = dma.vmem_to_hbm [thread:$0]  %s2279, 2048, %s2277, %s2265, 128, 128, 8
        $region96: #{tpu_custom_call.1} parent=75 // pred_fallthru
          _
      $region76: #{tpu_custom_call.1} parent=5 // pred_fallthru
        _
      %p2285 = scmp.le.s32.totalorder 2, %s27
      // Predicated region
      $region97: #{tpu_custom_call.1} parent=5 // pred_check
        %p2286 = pneg %p2285
      $region98: #{tpu_custom_call.1} parent=5 // pred_check_branch
        %2288 = sbr.rel (%p2286) target = $region100
      $region99: #{tpu_custom_call.1} parent=5 // pred_region
        %s2289 = ssub.s32 %s27, 2
        // Predicated region
        $region101: #{tpu_custom_call.1} parent=99 // pred_check
          %p2290 = pneg %p355
        $region102: #{tpu_custom_call.1} parent=99 // pred_check_branch
          %2292 = sbr.rel (%p2290) target = $region104
        $region103: #{tpu_custom_call.1} parent=99 // pred_region
          %s2293 = sand.u32 %s340, 1
          %s2294 = scalar_lea.sflag [#allocation5], %s2293
          %s2295 = sand.u32 %s340, 1
          %s2296 = smul.addr %s2295, 128
          %s2297 = scalar_lea.vmem [#allocation11], %s2296
          %2298 = dma.done %s2294, 2048
        $region104: #{tpu_custom_call.1} parent=99 // pred_fallthru
          _
      $region100: #{tpu_custom_call.1} parent=5 // pred_fallthru
        _
    $region6: #{tpu_custom_call.1} parent=1 // loop_footer
      %s31 = sadd.s32 1, %s27
    $region7: #{tpu_custom_call.1} parent=1 // loop_footer_branch
      %26 = sbr.rel target = $region3
    $region8: #{tpu_custom_call.1} parent=1 // loop_exit
      _
    %2299 = vsyncpa [#allocation4], 1
    %s2300 = scalar_lea.sflag [#allocation4], 1
    %2301 = vsyncpa %s2300, 1
    %2302 = vsyncpa [#allocation7], 1
    %2303 = vsyncpa [#allocation10], 1
    %2304 = vsyncpa [#allocation5], 1
    %s2305 = scalar_lea.sflag [#allocation5], 1
    %2306 = vsyncpa %s2305, 1

</llo_original>
